<compile_context>
chip_gen: v5e
topology: v5e:2x2
jax: 0.10.0
libtpu: 0.0.40
codegen_flags: <defaults>
</compile_context>

<pallas_src>
import functools

import jax
import jax.numpy as jnp
from jax.experimental import pallas as pl
from jax.experimental.pallas import tpu as pltpu

EPS = 1e-5
_MAX_TOKEN_UNROLL = 16    # cap on the static per-sample token-matmul unroll


def _leaky_relu(x, slope):
    if 0.0 <= slope <= 1.0:
        # Single VALU max instead of cmp + select.
        return jnp.maximum(x, slope * x)
    return jnp.where(x >= 0, x, slope * x)


def _layer_norm(x, gamma, beta, n_real):
    # x: (N, C_pad) f32; gamma/beta: (1, C_pad).  Statistics over the n_real
    # leading channels only (padded lanes are guaranteed zero by the caller).
    # E[x^2] - mu^2: the two cross-lane reductions are independent.
    inv_n = 1.0 / float(n_real)
    mu = jnp.sum(x, axis=-1, keepdims=True) * inv_n
    ms = jnp.sum(x * x, axis=-1, keepdims=True) * inv_n
    var = jnp.maximum(ms - mu * mu, 0.0)
    return (x - mu) * jax.lax.rsqrt(var + EPS) * gamma + beta


def _mm_nt(a_bf16, w_bf16):
    # y = a @ W^T with W stored PyTorch-style (out, in): contract the last dim
    # of both operands (lane-dim contraction); f32 accumulation on the MXU.
    return jax.lax.dot_general(
        a_bf16, w_bf16,
        dimension_numbers=(((1,), (1,)), ((), ())),
        preferred_element_type=jnp.float32)


def mixer_kernel(x_ref,
                 g1_ref, b1_ref,                 # LayerNorm 1: (1, Cp)
                 wt1_ref, bt1_ref,               # token Linear 1: (Sp,Sp) bf16, (Sp,1)
                 wt2_ref, bt2_ref,               # token Linear 2: (Sp,Sp) bf16, (Sp,1)
                 g2_ref, b2_ref,                 # LayerNorm 2: (1, Cp)
                 wc1_ref, bc1_ref,               # channel Linear 1: (Cp,Cp) bf16, (1,Cp)
                 wc2_ref, bc2_ref,               # channel Linear 2: (Cp,Cp) bf16, (1,Cp)
                 o_ref,
                 *, slope, c_real):
    tb, s, c = x_ref.shape
    x2d = x_ref[...].astype(jnp.float32).reshape(tb * s, c)    # rows = (b, s)

    # Hoist small parameter reads once.
    g1 = g1_ref[...]; b1 = b1_ref[...]
    g2 = g2_ref[...]; b2 = b2_ref[...]
    wt1 = wt1_ref[...]; wt2 = wt2_ref[...]
    bt1 = bt1_ref[...]; bt2 = bt2_ref[...]        # (Sp, 1): broadcast along lanes
    bc1 = bc1_ref[...]; bc2 = bc2_ref[...]
    wc1 = wc1_ref[...]; wc2 = wc2_ref[...]

    # --- LayerNorm 1 (batch-folded over TB*S rows) ---------------------------
    xn1 = _layer_norm(x2d, g1, b1, c_real)                      # (TB*S, C) f32
    xn1_bf = xn1.astype(jnp.bfloat16)                           # cast once

    # --- token-mixing branch: Wt1 @ x -> LeakyReLU -> Wt2 @ h ----------------
    # Weight-on-the-left matmuls contract S on the sublane axis, so the data
    # never leaves (s, c) layout and no XLU lane transposes are issued.
    ys = []
    for b in range(tb):                                         # static unroll
        xb = xn1_bf[b * s:(b + 1) * s, :]                       # (Sp, Cp) bf16
        hb = _leaky_relu(
            jnp.dot(wt1, xb, preferred_element_type=jnp.float32) + bt1, slope)
        yb = jnp.dot(wt2, hb.astype(jnp.bfloat16),
                     preferred_element_type=jnp.float32) + bt2
        ys.append(yb)
    y = ys[0] if tb == 1 else jnp.concatenate(ys, axis=0)       # (TB*S, C)

    # residual 1 (dropout = identity in eval mode).  The token biases broadcast
    # into the padded channel lanes; zero them so LN2's masked statistics and
    # the final output stay exact.
    x2 = y + x2d
    if c != c_real:
        lane = jax.lax.broadcasted_iota(jnp.int32, (1, c), 1)
        x2 = jnp.where(lane < c_real, x2, 0.0)

    # --- channel-mixing branch: LN2 -> Linear(C,C) -> LeakyReLU -> Linear ----
    xn2 = _layer_norm(x2, g2, b2, c_real)                       # (TB*S, C)
    h2 = _leaky_relu(_mm_nt(xn2.astype(jnp.bfloat16), wc1) + bc1, slope)
    x3 = _mm_nt(h2.astype(jnp.bfloat16), wc2) + bc2

    o_ref[...] = (x3 + x2).reshape(tb, s, c).astype(o_ref.dtype)


def _round_up(v, m):
    return ((v + m - 1) // m) * m


def _vmem_capacity_bytes():
    # Narrow, fallback-only probe of the physical per-core VMEM.
    try:
        return int(pltpu.get_tpu_info().vmem_capacity_bytes)
    except Exception:
        return 64 << 20          # conservative default (v7x per-TensorCore)


def _pick_block_batch(batch, block_budget_bytes, per_sample_bytes,
                      max_unroll=_MAX_TOKEN_UNROLL):
    """Pick the per-step batch tile TB.

    Prefers: >=2 grid steps (pipelining + v7x core split), an even step count
    (2-core balance), minimal batch padding, then the largest block.
    """
    cap = max(1, min(block_budget_bytes // max(per_sample_bytes, 1),
                     max_unroll, batch))
    best_tb, best_key = 1, None
    for tb in range(int(cap), 0, -1):
        steps = -(-batch // tb)
        pad = steps * tb - batch
        key = (steps < 2, steps % 2 if steps > 1 else 1, pad)
        if best_key is None or key < best_key:
            best_key, best_tb = key, tb
    return int(best_tb)


def mlp_mixer_layer(x, params, *, slope=0.2, block_batch=None):
    """x: (B, S, C) float32 -> (B, S, C) float32 (eval-mode forward)."""
    B, S, C = x.shape
    g1, b1, wt1, bt1, wt2, bt2, g2, b2, wc1, bc1, wc2, bc2 = params

    # Lane/sublane padding: C to 128 (lane-dense stores, full MXU N dim),
    # S to 16 (bf16 sublane alignment of the per-sample token slices).
    Sp = _round_up(S, 16)
    Cp = _round_up(C, 128)

    def pad2(w, r, c_):
        return jnp.pad(w, ((0, r - w.shape[0]), (0, c_ - w.shape[1])))

    def pad1(v, n):
        return jnp.pad(v, (0, n - v.shape[0]))

    # Weights in bf16 (native MXU dtype, half the DMA/VMEM); zero padding keeps
    # padded rows/cols inert.  Biases / LN affine stay f32.
    wdt = jnp.bfloat16
    wt1_ = pad2(wt1, Sp, Sp).astype(wdt)
    wt2_ = pad2(wt2, Sp, Sp).astype(wdt)
    wc1_ = pad2(wc1, Cp, Cp).astype(wdt)
    wc2_ = pad2(wc2, Cp, Cp).astype(wdt)
    g1_ = pad1(g1, Cp).reshape(1, Cp).astype(jnp.float32)
    b1_ = pad1(b1, Cp).reshape(1, Cp).astype(jnp.float32)
    g2_ = pad1(g2, Cp).reshape(1, Cp).astype(jnp.float32)
    b2_ = pad1(b2, Cp).reshape(1, Cp).astype(jnp.float32)
    bt1_ = pad1(bt1, Sp).reshape(Sp, 1).astype(jnp.float32)    # lane-broadcast bias
    bt2_ = pad1(bt2, Sp).reshape(Sp, 1).astype(jnp.float32)
    bc1_ = pad1(bc1, Cp).reshape(1, Cp).astype(jnp.float32)
    bc2_ = pad1(bc2, Cp).reshape(1, Cp).astype(jnp.float32)

    # ---------- generation-aware VMEM / block budget --------------------------
    vmem_cap = _vmem_capacity_bytes()
    # Never hand Mosaic the full physical VMEM (it needs internal scratch for
    # casts/copies): ~50 MiB on 64 MiB v7x cores, ~100 MiB on 128 MiB v5e/v6e.
    vmem_ceiling = int(min(vmem_cap - (12 << 20), vmem_cap * 0.80))

    w_bytes = 2 * Sp * Sp * 2 + 2 * Cp * Cp * 2               # bf16 weights
    misc_bytes = (6 * Cp) * 4 + 2 * Sp * 128 * 4              # LN params + lane-padded biases
    per_sample = Sp * Cp * 4
    # Working set per grid step ~ 4x block (double-buffered in+out) plus ~8x
    # block of f32/bf16 intermediates (xn1, xn1_bf, y, x2, xn2, h2, x3, casts),
    # plus double-buffered weights and slack for Mosaic-internal copies.
    slack = 4 << 20
    fixed = 2 * (w_bytes + misc_bytes) + slack
    block_budget = max(per_sample, (vmem_ceiling - fixed) // 12)

    TB = (_pick_block_batch(B, block_budget, per_sample)
          if block_batch is None else int(block_batch))
    steps = -(-B // TB)
    Bp = steps * TB                                           # padded batch

    xp = x
    if (Bp, Sp, Cp) != (B, S, C):
        xp = jnp.pad(x, ((0, Bp - B), (0, Sp - S), (0, Cp - C)))

    vmem_need = 12 * TB * per_sample + fixed
    vmem_limit = int(min(vmem_ceiling, max(vmem_need, 32 << 20)))

    const = lambda i: (0, 0)        # grid-invariant operands: DMA'd once per core
    in_specs = [
        pl.BlockSpec((TB, Sp, Cp), lambda i: (i, 0, 0)),       # x
        pl.BlockSpec((1, Cp), const), pl.BlockSpec((1, Cp), const),   # LN1
        pl.BlockSpec((Sp, Sp), const), pl.BlockSpec((Sp, 1), const),  # token W1, b1
        pl.BlockSpec((Sp, Sp), const), pl.BlockSpec((Sp, 1), const),  # token W2, b2
        pl.BlockSpec((1, Cp), const), pl.BlockSpec((1, Cp), const),   # LN2
        pl.BlockSpec((Cp, Cp), const), pl.BlockSpec((1, Cp), const),  # channel W1, b1
        pl.BlockSpec((Cp, Cp), const), pl.BlockSpec((1, Cp), const),  # channel W2, b2
    ]

    out = pl.pallas_call(
        functools.partial(mixer_kernel, slope=slope, c_real=C),
        out_shape=jax.ShapeDtypeStruct((Bp, Sp, Cp), x.dtype),
        grid_spec=pltpu.PrefetchScalarGridSpec(
            num_scalar_prefetch=0,
            grid=(steps,),
            in_specs=in_specs,
            out_specs=pl.BlockSpec((TB, Sp, Cp), lambda i: (i, 0, 0)),
        ),
        compiler_params=pltpu.CompilerParams(
            dimension_semantics=("parallel",),
            vmem_limit_bytes=vmem_limit),
    )(xp, g1_, b1_, wt1_, bt1_, wt2_, bt2_, g2_, b2_, wc1_, bc1_, wc2_, bc2_)

    if (Bp, Sp, Cp) != (B, S, C):
        out = out[:B, :S, :C]
    return out


def reference(x, params, *, slope=0.2):
    """Pure-JAX f32 reference matching the PyTorch forward (eval mode)."""
    g1, b1, wt1, bt1, wt2, bt2, g2, b2, wc1, bc1, wc2, bc2 = params

    def ln(v, g, b):
        mu = jnp.mean(v, axis=-1, keepdims=True)
        var = jnp.mean((v - mu) ** 2, axis=-1, keepdims=True)
        return (v - mu) / jnp.sqrt(var + EPS) * g + b

    def lrelu(v):
        return jnp.where(v >= 0, v, slope * v)

    x1 = ln(x, g1, b1)                                   # (B, S, C)
    xt = jnp.swapaxes(x1, 1, 2)                          # (B, C, S)
    h = lrelu(jnp.einsum('bcs,os->bco', xt, wt1) + bt1)
    xt = jnp.einsum('bcs,os->bco', h, wt2) + bt2
    x1 = jnp.swapaxes(xt, 1, 2)                          # (B, S, C)
    x2 = x1 + x
    x2n = ln(x2, g2, b2)
    h2 = lrelu(jnp.einsum('bsc,oc->bso', x2n, wc1) + bc1)
    x3 = jnp.einsum('bsc,oc->bso', h2, wc2) + bc2
    return x3 + x2


def make_params(key, seq_len, channel_dim):
    ks = jax.random.split(key, 8)
    scale_t = 1.0 / jnp.sqrt(seq_len)
    scale_c = 1.0 / jnp.sqrt(channel_dim)
    g1 = jnp.ones((channel_dim,), jnp.float32)
    b1 = jnp.zeros((channel_dim,), jnp.float32)
    g2 = jnp.ones((channel_dim,), jnp.float32)
    b2 = jnp.zeros((channel_dim,), jnp.float32)
    wt1 = jax.random.uniform(ks[0], (seq_len, seq_len), jnp.float32, -scale_t, scale_t)
    bt1 = jax.random.uniform(ks[1], (seq_len,), jnp.float32, -scale_t, scale_t)
    wt2 = jax.random.uniform(ks[2], (seq_len, seq_len), jnp.float32, -scale_t, scale_t)
    bt2 = jax.random.uniform(ks[3], (seq_len,), jnp.float32, -scale_t, scale_t)
    wc1 = jax.random.uniform(ks[4], (channel_dim, channel_dim), jnp.float32, -scale_c, scale_c)
    bc1 = jax.random.uniform(ks[5], (channel_dim,), jnp.float32, -scale_c, scale_c)
    wc2 = jax.random.uniform(ks[6], (channel_dim, channel_dim), jnp.float32, -scale_c, scale_c)
    bc2 = jax.random.uniform(ks[7], (channel_dim,), jnp.float32, -scale_c, scale_c)
    return (g1, b1, wt1, bt1, wt2, bt2, g2, b2, wc1, bc1, wc2, bc2)


if __name__ == "__main__":
    key = jax.random.PRNGKey(0)
    # Two small configs: (even batch, aligned S) and (odd batch, odd S/C) to
    # exercise the batch/sequence/channel padding paths.
    for (B, S, C) in [(8, 8, 16), (3, 10, 20)]:
        kx, kp, key = jax.random.split(key, 3)
        x = jax.random.normal(kx, (B, S, C), jnp.float32)
        params = make_params(kp, S, C)

        out = jax.block_until_ready(mlp_mixer_layer(x, params, slope=0.2))
        ref = reference(x, params, slope=0.2)

        assert out.shape == (B, S, C)
        # bf16 matmul operands vs f32 reference -> relaxed tolerance.
        assert jnp.allclose(out, ref, atol=5e-2, rtol=5e-2), (
            f"mismatch vs reference at {(B, S, C)}, max abs err = "
            + str(float(jnp.max(jnp.abs(out - ref)))))
    print("KERNEL_OK")
</pallas_src>

<mosaic_0001>
module attributes {stable_mosaic.version = 11 : i64} {
  func.func @mixer_kernel(%arg0: i32, %arg1: memref<4x16x128xf32, #tpu.memory_space<vmem>>, %arg2: memref<1x128xf32, #tpu.memory_space<vmem>>, %arg3: memref<1x128xf32, #tpu.memory_space<vmem>>, %arg4: memref<16x16xbf16, #tpu.memory_space<vmem>>, %arg5: memref<16x1xf32, #tpu.memory_space<vmem>>, %arg6: memref<16x16xbf16, #tpu.memory_space<vmem>>, %arg7: memref<16x1xf32, #tpu.memory_space<vmem>>, %arg8: memref<1x128xf32, #tpu.memory_space<vmem>>, %arg9: memref<1x128xf32, #tpu.memory_space<vmem>>, %arg10: memref<128x128xbf16, #tpu.memory_space<vmem>>, %arg11: memref<1x128xf32, #tpu.memory_space<vmem>>, %arg12: memref<128x128xbf16, #tpu.memory_space<vmem>>, %arg13: memref<1x128xf32, #tpu.memory_space<vmem>>, %arg14: memref<4x16x128xf32, #tpu.memory_space<vmem>>) attributes {dimension_semantics = [#tpu.dimension_semantics<parallel>], iteration_bounds = array<i64: 2>, scalar_prefetch = 0 : i64, scratch_operands = 0 : i64, tpu.core_type = #tpu.core_type<tc>, window_params = [{transform_indices = @transform_0, window_bounds = array<i64: 4, 16, 128>}, {pipeline_mode = #tpu.pipeline_mode<synchronous>, transform_indices = @transform_1, window_bounds = array<i64: 1, 128>}, {pipeline_mode = #tpu.pipeline_mode<synchronous>, transform_indices = @transform_2, window_bounds = array<i64: 1, 128>}, {pipeline_mode = #tpu.pipeline_mode<synchronous>, transform_indices = @transform_3, window_bounds = array<i64: 16, 16>}, {pipeline_mode = #tpu.pipeline_mode<synchronous>, transform_indices = @transform_4, window_bounds = array<i64: 16, 1>}, {pipeline_mode = #tpu.pipeline_mode<synchronous>, transform_indices = @transform_5, window_bounds = array<i64: 16, 16>}, {pipeline_mode = #tpu.pipeline_mode<synchronous>, transform_indices = @transform_6, window_bounds = array<i64: 16, 1>}, {pipeline_mode = #tpu.pipeline_mode<synchronous>, transform_indices = @transform_7, window_bounds = array<i64: 1, 128>}, {pipeline_mode = #tpu.pipeline_mode<synchronous>, transform_indices = @transform_8, window_bounds = array<i64: 1, 128>}, {pipeline_mode = #tpu.pipeline_mode<synchronous>, transform_indices = @transform_9, window_bounds = array<i64: 128, 128>}, {pipeline_mode = #tpu.pipeline_mode<synchronous>, transform_indices = @transform_10, window_bounds = array<i64: 1, 128>}, {pipeline_mode = #tpu.pipeline_mode<synchronous>, transform_indices = @transform_11, window_bounds = array<i64: 128, 128>}, {pipeline_mode = #tpu.pipeline_mode<synchronous>, transform_indices = @transform_12, window_bounds = array<i64: 1, 128>}, {transform_indices = @transform_13, window_bounds = array<i64: 4, 16, 128>}]} {
    %c0 = arith.constant 0 : index
    %c0_0 = arith.constant 0 : index
    %c0_1 = arith.constant 0 : index
    %0 = vector.load %arg1[%c0, %c0_0, %c0_1] : memref<4x16x128xf32, #tpu.memory_space<vmem>>, vector<4x16x128xf32>
    %1 = vector.shape_cast %0 : vector<4x16x128xf32> to vector<64x128xf32>
    %c0_2 = arith.constant 0 : index
    %c0_3 = arith.constant 0 : index
    %2 = vector.load %arg2[%c0_2, %c0_3] : memref<1x128xf32, #tpu.memory_space<vmem>>, vector<1x128xf32>
    %c0_4 = arith.constant 0 : index
    %c0_5 = arith.constant 0 : index
    %3 = vector.load %arg3[%c0_4, %c0_5] : memref<1x128xf32, #tpu.memory_space<vmem>>, vector<1x128xf32>
    %c0_6 = arith.constant 0 : index
    %c0_7 = arith.constant 0 : index
    %4 = vector.load %arg8[%c0_6, %c0_7] : memref<1x128xf32, #tpu.memory_space<vmem>>, vector<1x128xf32>
    %c0_8 = arith.constant 0 : index
    %c0_9 = arith.constant 0 : index
    %5 = vector.load %arg9[%c0_8, %c0_9] : memref<1x128xf32, #tpu.memory_space<vmem>>, vector<1x128xf32>
    %c0_10 = arith.constant 0 : index
    %c0_11 = arith.constant 0 : index
    %6 = vector.load %arg4[%c0_10, %c0_11] : memref<16x16xbf16, #tpu.memory_space<vmem>>, vector<16x16xbf16>
    %c0_12 = arith.constant 0 : index
    %c0_13 = arith.constant 0 : index
    %7 = vector.load %arg6[%c0_12, %c0_13] : memref<16x16xbf16, #tpu.memory_space<vmem>>, vector<16x16xbf16>
    %c0_14 = arith.constant 0 : index
    %c0_15 = arith.constant 0 : index
    %8 = vector.load %arg5[%c0_14, %c0_15] : memref<16x1xf32, #tpu.memory_space<vmem>>, vector<16x1xf32>
    %c0_16 = arith.constant 0 : index
    %c0_17 = arith.constant 0 : index
    %9 = vector.load %arg7[%c0_16, %c0_17] : memref<16x1xf32, #tpu.memory_space<vmem>>, vector<16x1xf32>
    %c0_18 = arith.constant 0 : index
    %c0_19 = arith.constant 0 : index
    %10 = vector.load %arg11[%c0_18, %c0_19] : memref<1x128xf32, #tpu.memory_space<vmem>>, vector<1x128xf32>
    %c0_20 = arith.constant 0 : index
    %c0_21 = arith.constant 0 : index
    %11 = vector.load %arg13[%c0_20, %c0_21] : memref<1x128xf32, #tpu.memory_space<vmem>>, vector<1x128xf32>
    %c0_22 = arith.constant 0 : index
    %c0_23 = arith.constant 0 : index
    %12 = vector.load %arg10[%c0_22, %c0_23] : memref<128x128xbf16, #tpu.memory_space<vmem>>, vector<128x128xbf16>
    %c0_24 = arith.constant 0 : index
    %c0_25 = arith.constant 0 : index
    %13 = vector.load %arg12[%c0_24, %c0_25] : memref<128x128xbf16, #tpu.memory_space<vmem>>, vector<128x128xbf16>
    %cst = arith.constant dense<0.000000e+00> : vector<64xf32>
    %14 = vector.multi_reduction <add>, %1, %cst [1] : vector<64x128xf32> to vector<64xf32>
    %15 = vector.shape_cast %14 : vector<64xf32> to vector<64x1xf32>
    %cst_26 = arith.constant 6.250000e-02 : f32
    %16 = vector.broadcast %cst_26 : f32 to vector<64x1xf32>
    %17 = arith.mulf %15, %16 : vector<64x1xf32>
    %18 = arith.mulf %1, %1 : vector<64x128xf32>
    %cst_27 = arith.constant dense<0.000000e+00> : vector<64xf32>
    %19 = vector.multi_reduction <add>, %18, %cst_27 [1] : vector<64x128xf32> to vector<64xf32>
    %20 = vector.shape_cast %19 : vector<64xf32> to vector<64x1xf32>
    %cst_28 = arith.constant 6.250000e-02 : f32
    %21 = vector.broadcast %cst_28 : f32 to vector<64x1xf32>
    %22 = arith.mulf %20, %21 : vector<64x1xf32>
    %23 = arith.mulf %17, %17 : vector<64x1xf32>
    %24 = arith.subf %22, %23 : vector<64x1xf32>
    %cst_29 = arith.constant 0.000000e+00 : f32
    %25 = vector.broadcast %cst_29 : f32 to vector<64x1xf32>
    %26 = arith.maximumf %24, %25 : vector<64x1xf32>
    %27 = vector.broadcast %17 : vector<64x1xf32> to vector<64x128xf32>
    %28 = arith.subf %1, %27 : vector<64x128xf32>
    %cst_30 = arith.constant 9.99999974E-6 : f32
    %29 = vector.broadcast %cst_30 : f32 to vector<64x1xf32>
    %30 = arith.addf %26, %29 : vector<64x1xf32>
    %31 = math.rsqrt %30 : vector<64x1xf32>
    %32 = vector.broadcast %31 : vector<64x1xf32> to vector<64x128xf32>
    %33 = arith.mulf %28, %32 : vector<64x128xf32>
    %34 = vector.broadcast %2 : vector<1x128xf32> to vector<64x128xf32>
    %35 = arith.mulf %33, %34 : vector<64x128xf32>
    %36 = vector.broadcast %3 : vector<1x128xf32> to vector<64x128xf32>
    %37 = arith.addf %35, %36 : vector<64x128xf32>
    %38 = arith.truncf %37 : vector<64x128xf32> to vector<64x128xbf16>
    %39 = vector.extract_strided_slice %38 {offsets = [0, 0], sizes = [16, 128], strides = [1, 1]} : vector<64x128xbf16> to vector<16x128xbf16>
    %cst_31 = arith.constant dense<0.000000e+00> : vector<16x128xf32>
    %40 = tpu.matmul %6, %39, %cst_31 {dimension_numbers = #tpu.dot_dimension_numbers<[1], [0], [0], [1], [0, 0, 1, 1], [], []>} : vector<16x16xbf16>, vector<16x128xbf16>, vector<16x128xf32> -> vector<16x128xf32>
    %41 = vector.broadcast %8 : vector<16x1xf32> to vector<16x128xf32>
    %42 = arith.addf %40, %41 : vector<16x128xf32>
    %cst_32 = arith.constant 2.000000e-01 : f32
    %43 = vector.broadcast %cst_32 : f32 to vector<16x128xf32>
    %44 = arith.mulf %43, %42 : vector<16x128xf32>
    %45 = arith.maximumf %42, %44 : vector<16x128xf32>
    %46 = arith.truncf %45 : vector<16x128xf32> to vector<16x128xbf16>
    %cst_33 = arith.constant dense<0.000000e+00> : vector<16x128xf32>
    %47 = tpu.matmul %7, %46, %cst_33 {dimension_numbers = #tpu.dot_dimension_numbers<[1], [0], [0], [1], [0, 0, 1, 1], [], []>} : vector<16x16xbf16>, vector<16x128xbf16>, vector<16x128xf32> -> vector<16x128xf32>
    %48 = vector.broadcast %9 : vector<16x1xf32> to vector<16x128xf32>
    %49 = arith.addf %47, %48 : vector<16x128xf32>
    %50 = vector.extract_strided_slice %38 {offsets = [16, 0], sizes = [16, 128], strides = [1, 1]} : vector<64x128xbf16> to vector<16x128xbf16>
    %cst_34 = arith.constant dense<0.000000e+00> : vector<16x128xf32>
    %51 = tpu.matmul %6, %50, %cst_34 {dimension_numbers = #tpu.dot_dimension_numbers<[1], [0], [0], [1], [0, 0, 1, 1], [], []>} : vector<16x16xbf16>, vector<16x128xbf16>, vector<16x128xf32> -> vector<16x128xf32>
    %52 = vector.broadcast %8 : vector<16x1xf32> to vector<16x128xf32>
    %53 = arith.addf %51, %52 : vector<16x128xf32>
    %cst_35 = arith.constant 2.000000e-01 : f32
    %54 = vector.broadcast %cst_35 : f32 to vector<16x128xf32>
    %55 = arith.mulf %54, %53 : vector<16x128xf32>
    %56 = arith.maximumf %53, %55 : vector<16x128xf32>
    %57 = arith.truncf %56 : vector<16x128xf32> to vector<16x128xbf16>
    %cst_36 = arith.constant dense<0.000000e+00> : vector<16x128xf32>
    %58 = tpu.matmul %7, %57, %cst_36 {dimension_numbers = #tpu.dot_dimension_numbers<[1], [0], [0], [1], [0, 0, 1, 1], [], []>} : vector<16x16xbf16>, vector<16x128xbf16>, vector<16x128xf32> -> vector<16x128xf32>
    %59 = vector.broadcast %9 : vector<16x1xf32> to vector<16x128xf32>
    %60 = arith.addf %58, %59 : vector<16x128xf32>
    %61 = vector.extract_strided_slice %38 {offsets = [32, 0], sizes = [16, 128], strides = [1, 1]} : vector<64x128xbf16> to vector<16x128xbf16>
    %cst_37 = arith.constant dense<0.000000e+00> : vector<16x128xf32>
    %62 = tpu.matmul %6, %61, %cst_37 {dimension_numbers = #tpu.dot_dimension_numbers<[1], [0], [0], [1], [0, 0, 1, 1], [], []>} : vector<16x16xbf16>, vector<16x128xbf16>, vector<16x128xf32> -> vector<16x128xf32>
    %63 = vector.broadcast %8 : vector<16x1xf32> to vector<16x128xf32>
    %64 = arith.addf %62, %63 : vector<16x128xf32>
    %cst_38 = arith.constant 2.000000e-01 : f32
    %65 = vector.broadcast %cst_38 : f32 to vector<16x128xf32>
    %66 = arith.mulf %65, %64 : vector<16x128xf32>
    %67 = arith.maximumf %64, %66 : vector<16x128xf32>
    %68 = arith.truncf %67 : vector<16x128xf32> to vector<16x128xbf16>
    %cst_39 = arith.constant dense<0.000000e+00> : vector<16x128xf32>
    %69 = tpu.matmul %7, %68, %cst_39 {dimension_numbers = #tpu.dot_dimension_numbers<[1], [0], [0], [1], [0, 0, 1, 1], [], []>} : vector<16x16xbf16>, vector<16x128xbf16>, vector<16x128xf32> -> vector<16x128xf32>
    %70 = vector.broadcast %9 : vector<16x1xf32> to vector<16x128xf32>
    %71 = arith.addf %69, %70 : vector<16x128xf32>
    %72 = vector.extract_strided_slice %38 {offsets = [48, 0], sizes = [16, 128], strides = [1, 1]} : vector<64x128xbf16> to vector<16x128xbf16>
    %cst_40 = arith.constant dense<0.000000e+00> : vector<16x128xf32>
    %73 = tpu.matmul %6, %72, %cst_40 {dimension_numbers = #tpu.dot_dimension_numbers<[1], [0], [0], [1], [0, 0, 1, 1], [], []>} : vector<16x16xbf16>, vector<16x128xbf16>, vector<16x128xf32> -> vector<16x128xf32>
    %74 = vector.broadcast %8 : vector<16x1xf32> to vector<16x128xf32>
    %75 = arith.addf %73, %74 : vector<16x128xf32>
    %cst_41 = arith.constant 2.000000e-01 : f32
    %76 = vector.broadcast %cst_41 : f32 to vector<16x128xf32>
    %77 = arith.mulf %76, %75 : vector<16x128xf32>
    %78 = arith.maximumf %75, %77 : vector<16x128xf32>
    %79 = arith.truncf %78 : vector<16x128xf32> to vector<16x128xbf16>
    %cst_42 = arith.constant dense<0.000000e+00> : vector<16x128xf32>
    %80 = tpu.matmul %7, %79, %cst_42 {dimension_numbers = #tpu.dot_dimension_numbers<[1], [0], [0], [1], [0, 0, 1, 1], [], []>} : vector<16x16xbf16>, vector<16x128xbf16>, vector<16x128xf32> -> vector<16x128xf32>
    %81 = vector.broadcast %9 : vector<16x1xf32> to vector<16x128xf32>
    %82 = arith.addf %80, %81 : vector<16x128xf32>
    %83 = tpu.concatenate %49, %60, %71, %82 in 0 : vector<16x128xf32>, vector<16x128xf32>, vector<16x128xf32>, vector<16x128xf32> -> vector<64x128xf32>
    %84 = arith.addf %83, %1 : vector<64x128xf32>
    %85 = tpu.iota {dimensions = array<i32: 1>} : vector<1x128xi32>
    %c16_i32 = arith.constant 16 : i32
    %86 = vector.broadcast %c16_i32 : i32 to vector<1x128xi32>
    %87 = arith.cmpi slt, %85, %86 : vector<1x128xi32>
    %cst_43 = arith.constant 0.000000e+00 : f32
    %88 = vector.shape_cast %87 : vector<1x128xi1> to vector<1x128xi1>
    %89 = vector.broadcast %88 : vector<1x128xi1> to vector<64x128xi1>
    %90 = vector.broadcast %cst_43 : f32 to vector<64x128xf32>
    %91 = arith.select %89, %84, %90 : vector<64x128xi1>, vector<64x128xf32>
    %cst_44 = arith.constant dense<0.000000e+00> : vector<64xf32>
    %92 = vector.multi_reduction <add>, %91, %cst_44 [1] : vector<64x128xf32> to vector<64xf32>
    %93 = vector.shape_cast %92 : vector<64xf32> to vector<64x1xf32>
    %cst_45 = arith.constant 6.250000e-02 : f32
    %94 = vector.broadcast %cst_45 : f32 to vector<64x1xf32>
    %95 = arith.mulf %93, %94 : vector<64x1xf32>
    %96 = arith.mulf %91, %91 : vector<64x128xf32>
    %cst_46 = arith.constant dense<0.000000e+00> : vector<64xf32>
    %97 = vector.multi_reduction <add>, %96, %cst_46 [1] : vector<64x128xf32> to vector<64xf32>
    %98 = vector.shape_cast %97 : vector<64xf32> to vector<64x1xf32>
    %cst_47 = arith.constant 6.250000e-02 : f32
    %99 = vector.broadcast %cst_47 : f32 to vector<64x1xf32>
    %100 = arith.mulf %98, %99 : vector<64x1xf32>
    %101 = arith.mulf %95, %95 : vector<64x1xf32>
    %102 = arith.subf %100, %101 : vector<64x1xf32>
    %cst_48 = arith.constant 0.000000e+00 : f32
    %103 = vector.broadcast %cst_48 : f32 to vector<64x1xf32>
    %104 = arith.maximumf %102, %103 : vector<64x1xf32>
    %105 = vector.broadcast %95 : vector<64x1xf32> to vector<64x128xf32>
    %106 = arith.subf %91, %105 : vector<64x128xf32>
    %cst_49 = arith.constant 9.99999974E-6 : f32
    %107 = vector.broadcast %cst_49 : f32 to vector<64x1xf32>
    %108 = arith.addf %104, %107 : vector<64x1xf32>
    %109 = math.rsqrt %108 : vector<64x1xf32>
    %110 = vector.broadcast %109 : vector<64x1xf32> to vector<64x128xf32>
    %111 = arith.mulf %106, %110 : vector<64x128xf32>
    %112 = vector.broadcast %4 : vector<1x128xf32> to vector<64x128xf32>
    %113 = arith.mulf %111, %112 : vector<64x128xf32>
    %114 = vector.broadcast %5 : vector<1x128xf32> to vector<64x128xf32>
    %115 = arith.addf %113, %114 : vector<64x128xf32>
    %116 = arith.truncf %115 : vector<64x128xf32> to vector<64x128xbf16>
    %cst_50 = arith.constant dense<0.000000e+00> : vector<64x128xf32>
    %117 = tpu.matmul %116, %12, %cst_50 {dimension_numbers = #tpu.dot_dimension_numbers<[1], [1], [0], [0], [0, 0, 1, 0], [], []>} : vector<64x128xbf16>, vector<128x128xbf16>, vector<64x128xf32> -> vector<64x128xf32>
    %118 = vector.broadcast %10 : vector<1x128xf32> to vector<64x128xf32>
    %119 = arith.addf %117, %118 : vector<64x128xf32>
    %cst_51 = arith.constant 2.000000e-01 : f32
    %120 = vector.broadcast %cst_51 : f32 to vector<64x128xf32>
    %121 = arith.mulf %120, %119 : vector<64x128xf32>
    %122 = arith.maximumf %119, %121 : vector<64x128xf32>
    %123 = arith.truncf %122 : vector<64x128xf32> to vector<64x128xbf16>
    %cst_52 = arith.constant dense<0.000000e+00> : vector<64x128xf32>
    %124 = tpu.matmul %123, %13, %cst_52 {dimension_numbers = #tpu.dot_dimension_numbers<[1], [1], [0], [0], [0, 0, 1, 0], [], []>} : vector<64x128xbf16>, vector<128x128xbf16>, vector<64x128xf32> -> vector<64x128xf32>
    %125 = vector.broadcast %11 : vector<1x128xf32> to vector<64x128xf32>
    %126 = arith.addf %124, %125 : vector<64x128xf32>
    %127 = arith.addf %126, %91 : vector<64x128xf32>
    %128 = vector.shape_cast %127 : vector<64x128xf32> to vector<4x16x128xf32>
    %c0_53 = arith.constant 0 : index
    %c0_54 = arith.constant 0 : index
    %c0_55 = arith.constant 0 : index
    %129 = vector.load %arg14[%c0_53, %c0_54, %c0_55] : memref<4x16x128xf32, #tpu.memory_space<vmem>>, vector<4x16x128xf32>
    tpu.vector_store %arg14[%c0_53, %c0_54, %c0_55], %128 {strides = array<i32>} : memref<4x16x128xf32, #tpu.memory_space<vmem>>, vector<4x16x128xf32>,
    return
  }
  func.func @transform_0(%arg0: i32) -> (i32, i32, i32) {
    %c0_i32 = arith.constant 0 : i32
    %c0_i32_0 = arith.constant 0 : i32
    %c0_i32_1 = arith.constant 0 : i32
    return %arg0, %c0_i32, %c0_i32_0 : i32, i32, i32
  }
  func.func @transform_1(%arg0: i32) -> (i32, i32) {
    %c0_i32 = arith.constant 0 : i32
    %c0_i32_0 = arith.constant 0 : i32
    %c0_i32_1 = arith.constant 0 : i32
    return %c0_i32, %c0_i32_0 : i32, i32
  }
  func.func @transform_2(%arg0: i32) -> (i32, i32) {
    %c0_i32 = arith.constant 0 : i32
    %c0_i32_0 = arith.constant 0 : i32
    %c0_i32_1 = arith.constant 0 : i32
    return %c0_i32, %c0_i32_0 : i32, i32
  }
  func.func @transform_3(%arg0: i32) -> (i32, i32) {
    %c0_i32 = arith.constant 0 : i32
    %c0_i32_0 = arith.constant 0 : i32
    %c0_i32_1 = arith.constant 0 : i32
    return %c0_i32, %c0_i32_0 : i32, i32
  }
  func.func @transform_4(%arg0: i32) -> (i32, i32) {
    %c0_i32 = arith.constant 0 : i32
    %c0_i32_0 = arith.constant 0 : i32
    %c0_i32_1 = arith.constant 0 : i32
    return %c0_i32, %c0_i32_0 : i32, i32
  }
  func.func @transform_5(%arg0: i32) -> (i32, i32) {
    %c0_i32 = arith.constant 0 : i32
    %c0_i32_0 = arith.constant 0 : i32
    %c0_i32_1 = arith.constant 0 : i32
    return %c0_i32, %c0_i32_0 : i32, i32
  }
  func.func @transform_6(%arg0: i32) -> (i32, i32) {
    %c0_i32 = arith.constant 0 : i32
    %c0_i32_0 = arith.constant 0 : i32
    %c0_i32_1 = arith.constant 0 : i32
    return %c0_i32, %c0_i32_0 : i32, i32
  }
  func.func @transform_7(%arg0: i32) -> (i32, i32) {
    %c0_i32 = arith.constant 0 : i32
    %c0_i32_0 = arith.constant 0 : i32
    %c0_i32_1 = arith.constant 0 : i32
    return %c0_i32, %c0_i32_0 : i32, i32
  }
  func.func @transform_8(%arg0: i32) -> (i32, i32) {
    %c0_i32 = arith.constant 0 : i32
    %c0_i32_0 = arith.constant 0 : i32
    %c0_i32_1 = arith.constant 0 : i32
    return %c0_i32, %c0_i32_0 : i32, i32
  }
  func.func @transform_9(%arg0: i32) -> (i32, i32) {
    %c0_i32 = arith.constant 0 : i32
    %c0_i32_0 = arith.constant 0 : i32
    %c0_i32_1 = arith.constant 0 : i32
    return %c0_i32, %c0_i32_0 : i32, i32
  }
  func.func @transform_10(%arg0: i32) -> (i32, i32) {
    %c0_i32 = arith.constant 0 : i32
    %c0_i32_0 = arith.constant 0 : i32
    %c0_i32_1 = arith.constant 0 : i32
    return %c0_i32, %c0_i32_0 : i32, i32
  }
  func.func @transform_11(%arg0: i32) -> (i32, i32) {
    %c0_i32 = arith.constant 0 : i32
    %c0_i32_0 = arith.constant 0 : i32
    %c0_i32_1 = arith.constant 0 : i32
    return %c0_i32, %c0_i32_0 : i32, i32
  }
  func.func @transform_12(%arg0: i32) -> (i32, i32) {
    %c0_i32 = arith.constant 0 : i32
    %c0_i32_0 = arith.constant 0 : i32
    %c0_i32_1 = arith.constant 0 : i32
    return %c0_i32, %c0_i32_0 : i32, i32
  }
  func.func @transform_13(%arg0: i32) -> (i32, i32, i32) {
    %c0_i32 = arith.constant 0 : i32
    %c0_i32_0 = arith.constant 0 : i32
    %c0_i32_1 = arith.constant 0 : i32
    return %arg0, %c0_i32, %c0_i32_0 : i32, i32, i32
  }
}

</mosaic_0001>

<llo_original>
// kernel: tpu_custom_call.1
$region0: #{tpu_custom_call.1}
  #allocation0 [shape = 'u32[]', space=smem, size = 0x4, offset = 0x4, fixed_abs, tag = 'smem constant byte address 0x4 - core index']
  #allocation1 [shape = 'u32[72,128]{1,0:T(1,128)}', space=vmem, size = 0x9000, scoped, tag = 'internal scratch']
  %s0 = inlined_call_operand.hbm [shape: f32[8,16,128], index: 0, kind: input, shape index: {}]
  %s1 = inlined_call_operand.vmem [shape: f32[1,128], index: 1, kind: input, shape index: {}]
  %s2 = inlined_call_operand.vmem [shape: f32[1,128], index: 2, kind: input, shape index: {}]
  %s3 = inlined_call_operand.vmem [shape: bf16[16,16], index: 3, kind: input, shape index: {}]
  %s4 = inlined_call_operand.vmem [shape: f32[16,1], index: 4, kind: input, shape index: {}]
  %s5 = inlined_call_operand.vmem [shape: bf16[16,16], index: 5, kind: input, shape index: {}]
  %s6 = inlined_call_operand.vmem [shape: f32[16,1], index: 6, kind: input, shape index: {}]
  %s7 = inlined_call_operand.vmem [shape: f32[1,128], index: 7, kind: input, shape index: {}]
  %s8 = inlined_call_operand.vmem [shape: f32[1,128], index: 8, kind: input, shape index: {}]
  %s9 = inlined_call_operand.hbm [shape: bf16[128,128], index: 9, kind: input, shape index: {}]
  %s10 = inlined_call_operand.vmem [shape: f32[1,128], index: 10, kind: input, shape index: {}]
  %s11 = inlined_call_operand.hbm [shape: bf16[128,128], index: 11, kind: input, shape index: {}]
  %s12 = inlined_call_operand.vmem [shape: f32[1,128], index: 12, kind: input, shape index: {}]
  %s13 = inlined_call_operand.hbm [shape: f32[8,16,128], index: 13, kind: output, shape index: {}]
  %s14 = sld [smem:[#allocation0]]
  $region97: #{tpu_custom_call.1} parent=0
    _
  %s16 = ssub.s32 1, %s14
  %s17 = scalar_select 0, %s16, %s14
  $region1: #{tpu_custom_call.1} parent=0
    #allocation2 [shape = 'u8[65536]{0}', space=vmem, size = 0x10000, scoped, tag = 'input window, operand 0']
    #allocation3 [shape = 's32[2]{0}', space=sflag, size = 0x8, scoped, tag = 'scoped memory for tpu_custom_call.1']
    #allocation4 [shape = 's32[2]{0}', space=sflag, size = 0x8, scoped, tag = 'scoped memory for tpu_custom_call.1']
    #allocation5 [shape = 'u8[32768]{0}', space=vmem, size = 0x8000, scoped, tag = 'input window, operand 9, single buffered']
    #allocation6 [shape = 's32[1]{0}', space=sflag, size = 0x4, scoped, tag = 'scoped memory for tpu_custom_call.1']
    #allocation7 [shape = 'u8[32768]{0}', space=vmem, size = 0x8000, scoped, tag = 'input window, operand 11, single buffered']
    #allocation8 [shape = 'u8[65536]{0}', space=vmem, size = 0x10000, scoped, tag = 'output window, operand 0']
    %18 = vsyncpa [#allocation3], 0
    %s19 = scalar_lea.sflag [#allocation3], 1
    %20 = vsyncpa %s19, 0
    %21 = vsyncpa [#allocation6], 0
    %22 = vsyncpa [#allocation4], 0
    %s23 = scalar_lea.sflag [#allocation4], 1
    %24 = vsyncpa %s23, 0
    loop: start=0, step=1, limit=4
    $region2: #{tpu_custom_call.1} parent=1 // loop_pre_header
      _
    $region3: #{tpu_custom_call.1} parent=1 // loop_header
      %s26 = sphi 0, %s30
      %p27 = scmp.ge.s32.totalorder %s26, 4
      %s36 = sphi 0, %s38
      %s39 = sphi 0, %s36
      %s40 = sphi 0, %s39
      %s56 = sphi 0, %s40
      %s60 = sphi 0, %s60
      %s62 = sphi 0, %s60
      %s63 = sphi 0, %s62
      %s77 = sphi 0, %s63
      %s81 = sphi 0, %s81
      %s83 = sphi 0, %s81
      %s84 = sphi 0, %s83
      %s98 = sphi 0, %s84
      %s102 = sphi 0, %s102
      %s104 = sphi 0, %s102
      %s105 = sphi 0, %s104
      %s119 = sphi 0, %s105
      %s123 = sphi 0, %s123
      %s125 = sphi 0, %s123
      %s126 = sphi 0, %s125
      %s140 = sphi 0, %s126
      %s144 = sphi 0, %s144
      %s146 = sphi 0, %s144
      %s147 = sphi 0, %s146
      %s161 = sphi 0, %s147
      %s165 = sphi 0, %s165
      %s167 = sphi 0, %s165
      %s168 = sphi 0, %s167
      %s182 = sphi 0, %s168
      %s186 = sphi 0, %s186
      %s188 = sphi 0, %s186
      %s189 = sphi 0, %s188
      %s203 = sphi 0, %s189
      %s207 = sphi 0, %s207
      %s209 = sphi 0, %s207
      %s210 = sphi 0, %s209
      %s224 = sphi 0, %s210
      %s228 = sphi 0, %s228
      %s230 = sphi 0, %s228
      %s231 = sphi 0, %s230
      %s245 = sphi 0, %s231
      %s249 = sphi 0, %s249
      %s251 = sphi 0, %s249
      %s252 = sphi 0, %s251
      %s266 = sphi 0, %s252
      %s270 = sphi 0, %s270
      %s272 = sphi 0, %s270
      %s273 = sphi 0, %s272
      %s287 = sphi 0, %s273
      %s291 = sphi 0, %s291
      %s293 = sphi 0, %s291
      %s294 = sphi 0, %s293
      %s308 = sphi 0, %s294
      %s314 = sphi 0, %s316
      %s317 = sphi 0, %s314
      %s318 = sphi 0, %s317
      %s334 = sphi 0, %s318
    $region4: #{tpu_custom_call.1} parent=1 // loop_header_branch
      %29 = sbr.rel (%p27) target = $region8
    $region5: #{tpu_custom_call.1} parent=1 // loop_body
      %s31 = ssub.s32 %s26, 1
      %s32 = ssub.s32 %s26, 2
      %s33 = sadd.s32 %s26, 1
      %s34 = ssub.s32 %s26, %s33
      %p35 = scmp.eq.s32.totalorder %s34, 0
      %s37 = sadd.s32 %s36, 1
      %s38 = scalar_select %p35, %s36, %s37
      %p41 = pneg %p35
      %p42 = scmp.eq.s32.totalorder %s26, 1
      %p43 = por %p41, %p42
      %p44 = scmp.ne.s32.totalorder %s36, %s39
      %p45 = scmp.eq.s32.totalorder %s26, 0
      %p46 = por %p44, %p45
      %p47 = scmp.ne.s32.totalorder %s36, %s39
      %p48 = scmp.eq.s32.totalorder %s31, 1
      %p49 = por %p47, %p48
      %p50 = scmp.ne.s32.totalorder %s39, %s40
      %p51 = scmp.eq.s32.totalorder %s31, 0
      %p52 = por %p50, %p51
      %p53 = scmp.ne.s32.totalorder %s39, %s40
      %p54 = scmp.eq.s32.totalorder %s32, 1
      %p55 = por %p53, %p54
      %p57 = scmp.ne.s32.totalorder %s40, %s56
      %p58 = scmp.eq.s32.totalorder %s32, 0
      %p59 = por %p57, %p58
      %s61 = sadd.s32 %s60, 1
      %p64 = scmp.eq.s32.totalorder %s26, 1
      %p65 = scmp.ne.s32.totalorder %s60, %s62
      %p66 = scmp.eq.s32.totalorder %s26, 0
      %p67 = por %p65, %p66
      %p68 = scmp.ne.s32.totalorder %s60, %s62
      %p69 = scmp.eq.s32.totalorder %s31, 1
      %p70 = por %p68, %p69
      %p71 = scmp.ne.s32.totalorder %s62, %s63
      %p72 = scmp.eq.s32.totalorder %s31, 0
      %p73 = por %p71, %p72
      %p74 = scmp.ne.s32.totalorder %s62, %s63
      %p75 = scmp.eq.s32.totalorder %s32, 1
      %p76 = por %p74, %p75
      %p78 = scmp.ne.s32.totalorder %s63, %s77
      %p79 = scmp.eq.s32.totalorder %s32, 0
      %p80 = por %p78, %p79
      %s82 = sadd.s32 %s81, 1
      %p85 = scmp.eq.s32.totalorder %s26, 1
      %p86 = scmp.ne.s32.totalorder %s81, %s83
      %p87 = scmp.eq.s32.totalorder %s26, 0
      %p88 = por %p86, %p87
      %p89 = scmp.ne.s32.totalorder %s81, %s83
      %p90 = scmp.eq.s32.totalorder %s31, 1
      %p91 = por %p89, %p90
      %p92 = scmp.ne.s32.totalorder %s83, %s84
      %p93 = scmp.eq.s32.totalorder %s31, 0
      %p94 = por %p92, %p93
      %p95 = scmp.ne.s32.totalorder %s83, %s84
      %p96 = scmp.eq.s32.totalorder %s32, 1
      %p97 = por %p95, %p96
      %p99 = scmp.ne.s32.totalorder %s84, %s98
      %p100 = scmp.eq.s32.totalorder %s32, 0
      %p101 = por %p99, %p100
      %s103 = sadd.s32 %s102, 1
      %p106 = scmp.eq.s32.totalorder %s26, 1
      %p107 = scmp.ne.s32.totalorder %s102, %s104
      %p108 = scmp.eq.s32.totalorder %s26, 0
      %p109 = por %p107, %p108
      %p110 = scmp.ne.s32.totalorder %s102, %s104
      %p111 = scmp.eq.s32.totalorder %s31, 1
      %p112 = por %p110, %p111
      %p113 = scmp.ne.s32.totalorder %s104, %s105
      %p114 = scmp.eq.s32.totalorder %s31, 0
      %p115 = por %p113, %p114
      %p116 = scmp.ne.s32.totalorder %s104, %s105
      %p117 = scmp.eq.s32.totalorder %s32, 1
      %p118 = por %p116, %p117
      %p120 = scmp.ne.s32.totalorder %s105, %s119
      %p121 = scmp.eq.s32.totalorder %s32, 0
      %p122 = por %p120, %p121
      %s124 = sadd.s32 %s123, 1
      %p127 = scmp.eq.s32.totalorder %s26, 1
      %p128 = scmp.ne.s32.totalorder %s123, %s125
      %p129 = scmp.eq.s32.totalorder %s26, 0
      %p130 = por %p128, %p129
      %p131 = scmp.ne.s32.totalorder %s123, %s125
      %p132 = scmp.eq.s32.totalorder %s31, 1
      %p133 = por %p131, %p132
      %p134 = scmp.ne.s32.totalorder %s125, %s126
      %p135 = scmp.eq.s32.totalorder %s31, 0
      %p136 = por %p134, %p135
      %p137 = scmp.ne.s32.totalorder %s125, %s126
      %p138 = scmp.eq.s32.totalorder %s32, 1
      %p139 = por %p137, %p138
      %p141 = scmp.ne.s32.totalorder %s126, %s140
      %p142 = scmp.eq.s32.totalorder %s32, 0
      %p143 = por %p141, %p142
      %s145 = sadd.s32 %s144, 1
      %p148 = scmp.eq.s32.totalorder %s26, 1
      %p149 = scmp.ne.s32.totalorder %s144, %s146
      %p150 = scmp.eq.s32.totalorder %s26, 0
      %p151 = por %p149, %p150
      %p152 = scmp.ne.s32.totalorder %s144, %s146
      %p153 = scmp.eq.s32.totalorder %s31, 1
      %p154 = por %p152, %p153
      %p155 = scmp.ne.s32.totalorder %s146, %s147
      %p156 = scmp.eq.s32.totalorder %s31, 0
      %p157 = por %p155, %p156
      %p158 = scmp.ne.s32.totalorder %s146, %s147
      %p159 = scmp.eq.s32.totalorder %s32, 1
      %p160 = por %p158, %p159
      %p162 = scmp.ne.s32.totalorder %s147, %s161
      %p163 = scmp.eq.s32.totalorder %s32, 0
      %p164 = por %p162, %p163
      %s166 = sadd.s32 %s165, 1
      %p169 = scmp.eq.s32.totalorder %s26, 1
      %p170 = scmp.ne.s32.totalorder %s165, %s167
      %p171 = scmp.eq.s32.totalorder %s26, 0
      %p172 = por %p170, %p171
      %p173 = scmp.ne.s32.totalorder %s165, %s167
      %p174 = scmp.eq.s32.totalorder %s31, 1
      %p175 = por %p173, %p174
      %p176 = scmp.ne.s32.totalorder %s167, %s168
      %p177 = scmp.eq.s32.totalorder %s31, 0
      %p178 = por %p176, %p177
      %p179 = scmp.ne.s32.totalorder %s167, %s168
      %p180 = scmp.eq.s32.totalorder %s32, 1
      %p181 = por %p179, %p180
      %p183 = scmp.ne.s32.totalorder %s168, %s182
      %p184 = scmp.eq.s32.totalorder %s32, 0
      %p185 = por %p183, %p184
      %s187 = sadd.s32 %s186, 1
      %p190 = scmp.eq.s32.totalorder %s26, 1
      %p191 = scmp.ne.s32.totalorder %s186, %s188
      %p192 = scmp.eq.s32.totalorder %s26, 0
      %p193 = por %p191, %p192
      %p194 = scmp.ne.s32.totalorder %s186, %s188
      %p195 = scmp.eq.s32.totalorder %s31, 1
      %p196 = por %p194, %p195
      %p197 = scmp.ne.s32.totalorder %s188, %s189
      %p198 = scmp.eq.s32.totalorder %s31, 0
      %p199 = por %p197, %p198
      %p200 = scmp.ne.s32.totalorder %s188, %s189
      %p201 = scmp.eq.s32.totalorder %s32, 1
      %p202 = por %p200, %p201
      %p204 = scmp.ne.s32.totalorder %s189, %s203
      %p205 = scmp.eq.s32.totalorder %s32, 0
      %p206 = por %p204, %p205
      %s208 = sadd.s32 %s207, 1
      %p211 = scmp.eq.s32.totalorder %s26, 1
      %p212 = scmp.ne.s32.totalorder %s207, %s209
      %p213 = scmp.eq.s32.totalorder %s26, 0
      %p214 = por %p212, %p213
      %p215 = scmp.ne.s32.totalorder %s207, %s209
      %p216 = scmp.eq.s32.totalorder %s31, 1
      %p217 = por %p215, %p216
      %p218 = scmp.ne.s32.totalorder %s209, %s210
      %p219 = scmp.eq.s32.totalorder %s31, 0
      %p220 = por %p218, %p219
      %p221 = scmp.ne.s32.totalorder %s209, %s210
      %p222 = scmp.eq.s32.totalorder %s32, 1
      %p223 = por %p221, %p222
      %p225 = scmp.ne.s32.totalorder %s210, %s224
      %p226 = scmp.eq.s32.totalorder %s32, 0
      %p227 = por %p225, %p226
      %s229 = sadd.s32 %s228, 1
      %p232 = scmp.eq.s32.totalorder %s26, 1
      %p233 = scmp.ne.s32.totalorder %s228, %s230
      %p234 = scmp.eq.s32.totalorder %s26, 0
      %p235 = por %p233, %p234
      %p236 = scmp.ne.s32.totalorder %s228, %s230
      %p237 = scmp.eq.s32.totalorder %s31, 1
      %p238 = por %p236, %p237
      %p239 = scmp.ne.s32.totalorder %s230, %s231
      %p240 = scmp.eq.s32.totalorder %s31, 0
      %p241 = por %p239, %p240
      %p242 = scmp.ne.s32.totalorder %s230, %s231
      %p243 = scmp.eq.s32.totalorder %s32, 1
      %p244 = por %p242, %p243
      %p246 = scmp.ne.s32.totalorder %s231, %s245
      %p247 = scmp.eq.s32.totalorder %s32, 0
      %p248 = por %p246, %p247
      %s250 = sadd.s32 %s249, 1
      %p253 = scmp.eq.s32.totalorder %s26, 1
      %p254 = scmp.ne.s32.totalorder %s249, %s251
      %p255 = scmp.eq.s32.totalorder %s26, 0
      %p256 = por %p254, %p255
      %p257 = scmp.ne.s32.totalorder %s249, %s251
      %p258 = scmp.eq.s32.totalorder %s31, 1
      %p259 = por %p257, %p258
      %p260 = scmp.ne.s32.totalorder %s251, %s252
      %p261 = scmp.eq.s32.totalorder %s31, 0
      %p262 = por %p260, %p261
      %p263 = scmp.ne.s32.totalorder %s251, %s252
      %p264 = scmp.eq.s32.totalorder %s32, 1
      %p265 = por %p263, %p264
      %p267 = scmp.ne.s32.totalorder %s252, %s266
      %p268 = scmp.eq.s32.totalorder %s32, 0
      %p269 = por %p267, %p268
      %s271 = sadd.s32 %s270, 1
      %p274 = scmp.eq.s32.totalorder %s26, 1
      %p275 = scmp.ne.s32.totalorder %s270, %s272
      %p276 = scmp.eq.s32.totalorder %s26, 0
      %p277 = por %p275, %p276
      %p278 = scmp.ne.s32.totalorder %s270, %s272
      %p279 = scmp.eq.s32.totalorder %s31, 1
      %p280 = por %p278, %p279
      %p281 = scmp.ne.s32.totalorder %s272, %s273
      %p282 = scmp.eq.s32.totalorder %s31, 0
      %p283 = por %p281, %p282
      %p284 = scmp.ne.s32.totalorder %s272, %s273
      %p285 = scmp.eq.s32.totalorder %s32, 1
      %p286 = por %p284, %p285
      %p288 = scmp.ne.s32.totalorder %s273, %s287
      %p289 = scmp.eq.s32.totalorder %s32, 0
      %p290 = por %p288, %p289
      %s292 = sadd.s32 %s291, 1
      %p295 = scmp.eq.s32.totalorder %s26, 1
      %p296 = scmp.ne.s32.totalorder %s291, %s293
      %p297 = scmp.eq.s32.totalorder %s26, 0
      %p298 = por %p296, %p297
      %p299 = scmp.ne.s32.totalorder %s291, %s293
      %p300 = scmp.eq.s32.totalorder %s31, 1
      %p301 = por %p299, %p300
      %p302 = scmp.ne.s32.totalorder %s293, %s294
      %p303 = scmp.eq.s32.totalorder %s31, 0
      %p304 = por %p302, %p303
      %p305 = scmp.ne.s32.totalorder %s293, %s294
      %p306 = scmp.eq.s32.totalorder %s32, 1
      %p307 = por %p305, %p306
      %p309 = scmp.ne.s32.totalorder %s294, %s308
      %p310 = scmp.eq.s32.totalorder %s32, 0
      %p311 = por %p309, %p310
      %s312 = ssub.s32 %s26, %s33
      %p313 = scmp.eq.s32.totalorder %s312, 0
      %s315 = sadd.s32 %s314, 1
      %s316 = scalar_select %p313, %s314, %s315
      %p319 = pneg %p313
      %p320 = scmp.eq.s32.totalorder %s26, 1
      %p321 = por %p319, %p320
      %p322 = scmp.ne.s32.totalorder %s314, %s317
      %p323 = scmp.eq.s32.totalorder %s26, 0
      %p324 = por %p322, %p323
      %p325 = scmp.ne.s32.totalorder %s314, %s317
      %p326 = scmp.eq.s32.totalorder %s31, 1
      %p327 = por %p325, %p326
      %p328 = scmp.ne.s32.totalorder %s317, %s318
      %p329 = scmp.eq.s32.totalorder %s31, 0
      %p330 = por %p328, %p329
      %p331 = scmp.ne.s32.totalorder %s317, %s318
      %p332 = scmp.eq.s32.totalorder %s32, 1
      %p333 = por %p331, %p332
      %p335 = scmp.ne.s32.totalorder %s318, %s334
      %p336 = scmp.eq.s32.totalorder %s32, 0
      %p337 = por %p335, %p336
      %p338 = scmp.le.s32.totalorder 1, %s26
      %p339 = scmp.lt.s32.totalorder %s26, 3
      %p340 = pnand %p338, %p339
      %p341 = pneg %p340
      // Predicated region
      $region9: #{tpu_custom_call.1} parent=5 // pred_check
        _
      $region10: #{tpu_custom_call.1} parent=5 // pred_check_branch
        %343 = sbr.rel (%p340) target = $region12
      $region11: #{tpu_custom_call.1} parent=5 // pred_region
        %s344 = ssub.s32 %s26, 1
        // Predicated region
        $region13: #{tpu_custom_call.1} parent=11 // pred_check
          %p345 = pneg %p73
        $region14: #{tpu_custom_call.1} parent=11 // pred_check_branch
          %347 = sbr.rel (%p345) target = $region16
        $region15: #{tpu_custom_call.1} parent=11 // pred_region
          _
        $region16: #{tpu_custom_call.1} parent=11 // pred_fallthru
          _
        // Predicated region
        $region17: #{tpu_custom_call.1} parent=11 // pred_check
          %p348 = pneg %p94
        $region18: #{tpu_custom_call.1} parent=11 // pred_check_branch
          %350 = sbr.rel (%p348) target = $region20
        $region19: #{tpu_custom_call.1} parent=11 // pred_region
          _
        $region20: #{tpu_custom_call.1} parent=11 // pred_fallthru
          _
        // Predicated region
        $region21: #{tpu_custom_call.1} parent=11 // pred_check
          %p351 = pneg %p115
        $region22: #{tpu_custom_call.1} parent=11 // pred_check_branch
          %353 = sbr.rel (%p351) target = $region24
        $region23: #{tpu_custom_call.1} parent=11 // pred_region
          _
        $region24: #{tpu_custom_call.1} parent=11 // pred_fallthru
          _
        // Predicated region
        $region25: #{tpu_custom_call.1} parent=11 // pred_check
          %p354 = pneg %p136
        $region26: #{tpu_custom_call.1} parent=11 // pred_check_branch
          %356 = sbr.rel (%p354) target = $region28
        $region27: #{tpu_custom_call.1} parent=11 // pred_region
          _
        $region28: #{tpu_custom_call.1} parent=11 // pred_fallthru
          _
        // Predicated region
        $region29: #{tpu_custom_call.1} parent=11 // pred_check
          %p357 = pneg %p157
        $region30: #{tpu_custom_call.1} parent=11 // pred_check_branch
          %359 = sbr.rel (%p357) target = $region32
        $region31: #{tpu_custom_call.1} parent=11 // pred_region
          _
        $region32: #{tpu_custom_call.1} parent=11 // pred_fallthru
          _
        // Predicated region
        $region33: #{tpu_custom_call.1} parent=11 // pred_check
          %p360 = pneg %p178
        $region34: #{tpu_custom_call.1} parent=11 // pred_check_branch
          %362 = sbr.rel (%p360) target = $region36
        $region35: #{tpu_custom_call.1} parent=11 // pred_region
          _
        $region36: #{tpu_custom_call.1} parent=11 // pred_fallthru
          _
        // Predicated region
        $region37: #{tpu_custom_call.1} parent=11 // pred_check
          %p363 = pneg %p199
        $region38: #{tpu_custom_call.1} parent=11 // pred_check_branch
          %365 = sbr.rel (%p363) target = $region40
        $region39: #{tpu_custom_call.1} parent=11 // pred_region
          _
        $region40: #{tpu_custom_call.1} parent=11 // pred_fallthru
          _
        // Predicated region
        $region41: #{tpu_custom_call.1} parent=11 // pred_check
          %p366 = pneg %p220
        $region42: #{tpu_custom_call.1} parent=11 // pred_check_branch
          %368 = sbr.rel (%p366) target = $region44
        $region43: #{tpu_custom_call.1} parent=11 // pred_region
          _
        $region44: #{tpu_custom_call.1} parent=11 // pred_fallthru
          _
        // Predicated region
        $region45: #{tpu_custom_call.1} parent=11 // pred_check
          %p369 = pneg %p241
        $region46: #{tpu_custom_call.1} parent=11 // pred_check_branch
          %371 = sbr.rel (%p369) target = $region48
        $region47: #{tpu_custom_call.1} parent=11 // pred_region
          %373 = vsyncadd [#allocation6], 0
          %s374 = sshll.u32 %s9, 4
          %s375 = int_to_ptr.hbm [resolvable:$true] %s374
          %s376 = sshll.u32 [#allocation5], 4
          %s377 = int_to_ptr.vmem [resolvable:$true] %s376
          %382 = dma.hbm_to_vmem [thread:$0]  %s375, 1024, %s377, [#allocation6], 64, 64, 4
        $region48: #{tpu_custom_call.1} parent=11 // pred_fallthru
          _
        // Predicated region
        $region49: #{tpu_custom_call.1} parent=11 // pred_check
          %p383 = pneg %p262
        $region50: #{tpu_custom_call.1} parent=11 // pred_check_branch
          %385 = sbr.rel (%p383) target = $region52
        $region51: #{tpu_custom_call.1} parent=11 // pred_region
          _
        $region52: #{tpu_custom_call.1} parent=11 // pred_fallthru
          _
        // Predicated region
        $region53: #{tpu_custom_call.1} parent=11 // pred_check
          %p386 = pneg %p283
        $region54: #{tpu_custom_call.1} parent=11 // pred_check_branch
          %388 = sbr.rel (%p386) target = $region56
        $region55: #{tpu_custom_call.1} parent=11 // pred_region
          %390 = vsyncadd [#allocation6], 0
          %s391 = sshll.u32 %s11, 4
          %s392 = int_to_ptr.hbm [resolvable:$true] %s391
          %s393 = sshll.u32 [#allocation7], 4
          %s394 = int_to_ptr.vmem [resolvable:$true] %s393
          %399 = dma.hbm_to_vmem [thread:$0]  %s392, 1024, %s394, [#allocation6], 64, 64, 4
        $region56: #{tpu_custom_call.1} parent=11 // pred_fallthru
          _
        // Predicated region
        $region57: #{tpu_custom_call.1} parent=11 // pred_check
          %p400 = pneg %p304
        $region58: #{tpu_custom_call.1} parent=11 // pred_check_branch
          %402 = sbr.rel (%p400) target = $region60
        $region59: #{tpu_custom_call.1} parent=11 // pred_region
          _
        $region60: #{tpu_custom_call.1} parent=11 // pred_fallthru
          _
      $region12: #{tpu_custom_call.1} parent=5 // pred_fallthru
        _
      %p403 = scmp.lt.s32.totalorder %s26, 2
      // Predicated region
      $region61: #{tpu_custom_call.1} parent=5 // pred_check
        %p404 = pneg %p403
      $region62: #{tpu_custom_call.1} parent=5 // pred_check_branch
        %406 = sbr.rel (%p404) target = $region64
      $region63: #{tpu_custom_call.1} parent=5 // pred_region
        // Predicated region
        $region65: #{tpu_custom_call.1} parent=63 // pred_check
          %p407 = pneg %p46
        $region66: #{tpu_custom_call.1} parent=63 // pred_check_branch
          %409 = sbr.rel (%p407) target = $region68
        $region67: #{tpu_custom_call.1} parent=63 // pred_region
          %s410 = sand.u32 %s36, 1
          %s411 = scalar_lea.sflag [#allocation3], %s410
          %s412 = sand.u32 %s36, 1
          %s413 = smul.addr %s412, 64
          %s414 = scalar_lea.vmem [#allocation2], %s413
          %s415 = smul.u32 4, %s26
          %417 = vsyncadd %s411, 0
          %s418 = smul.addr %s415, 2
          %s419 = smul.addr %s418, 8
          %s420 = scalar_lea.hbm %s0, %s419
          %s421 = sshll.u32 %s420, 4
          %s422 = int_to_ptr.hbm [resolvable:$true] %s421
          %s423 = sshll.u32 %s414, 4
          %s424 = int_to_ptr.vmem [resolvable:$true] %s423
          %429 = dma.hbm_to_vmem [thread:$0]  %s422, 1024, %s424, %s411, 128, 128, 8
        $region68: #{tpu_custom_call.1} parent=63 // pred_fallthru
          _
      $region64: #{tpu_custom_call.1} parent=5 // pred_fallthru
        _
      %p430 = scmp.le.s32.totalorder 1, %s26
      %p431 = scmp.lt.s32.totalorder %s26, 3
      %p432 = pnand %p430, %p431
      %p433 = pneg %p432
      // Predicated region
      $region69: #{tpu_custom_call.1} parent=5 // pred_check
        _
      $region70: #{tpu_custom_call.1} parent=5 // pred_check_branch
        %435 = sbr.rel (%p432) target = $region72
      $region71: #{tpu_custom_call.1} parent=5 // pred_region
        %s436 = ssub.s32 %s26, 1
        %s437 = sand.u32 %s39, 1
        %s438 = scalar_lea.sflag [#allocation3], %s437
        %s439 = sand.u32 %s39, 1
        %s440 = smul.addr %s439, 64
        %s441 = scalar_lea.vmem [#allocation2], %s440
        // Predicated region
        $region73: #{tpu_custom_call.1} parent=71 // pred_check
          %p442 = pneg %p52
        $region74: #{tpu_custom_call.1} parent=71 // pred_check_branch
          %444 = sbr.rel (%p442) target = $region76
        $region75: #{tpu_custom_call.1} parent=71 // pred_region
          %446 = dma.done %s438, 1024
        $region76: #{tpu_custom_call.1} parent=71 // pred_fallthru
          _
        // Predicated region
        $region77: #{tpu_custom_call.1} parent=71 // pred_check
          %p447 = pneg %p241
        $region78: #{tpu_custom_call.1} parent=71 // pred_check_branch
          %449 = sbr.rel (%p447) target = $region80
        $region79: #{tpu_custom_call.1} parent=71 // pred_region
          %451 = dma.done [#allocation6], 1024
        $region80: #{tpu_custom_call.1} parent=71 // pred_fallthru
          _
        // Predicated region
        $region81: #{tpu_custom_call.1} parent=71 // pred_check
          %p452 = pneg %p283
        $region82: #{tpu_custom_call.1} parent=71 // pred_check_branch
          %454 = sbr.rel (%p452) target = $region84
        $region83: #{tpu_custom_call.1} parent=71 // pred_region
          %456 = dma.done [#allocation6], 1024
        $region84: #{tpu_custom_call.1} parent=71 // pred_fallthru
          _
        %s457 = sand.u32 %s39, 1
        %s458 = scalar_lea.sflag [#allocation3], %s457
        %s459 = sand.u32 %s39, 1
        %s460 = smul.addr %s459, 64
        %s461 = scalar_lea.vmem [#allocation2], %s460
        %p462 = pneg %p52
        %p463 = pneg %p49
        %p464 = pneg %p73
        %p465 = pneg %p70
        %p466 = pneg %p94
        %p467 = pneg %p91
        %p468 = pneg %p115
        %p469 = pneg %p112
        %p470 = pneg %p136
        %p471 = pneg %p133
        %p472 = pneg %p157
        %p473 = pneg %p154
        %p474 = pneg %p178
        %p475 = pneg %p175
        %p476 = pneg %p199
        %p477 = pneg %p196
        %p478 = pneg %p220
        %p479 = pneg %p217
        %p480 = pneg %p241
        %p481 = pneg %p238
        %p482 = pneg %p262
        %p483 = pneg %p259
        %p484 = pneg %p283
        %p485 = pneg %p280
        %p486 = pneg %p304
        %p487 = pneg %p301
        %p488 = pneg %p330
        %p489 = pneg %p327
        %s490 = sand.u32 %s317, 1
        %s491 = scalar_lea.sflag [#allocation4], %s490
        %s492 = sand.u32 %s317, 1
        %s493 = smul.addr %s492, 64
        %s494 = scalar_lea.vmem [#allocation8], %s493
        %s495 = smul.u32 4, %s31
        %s496 = smul.u32 4, %s31
        %v498 = vld [vmem:[%s441] sm:$0xff]
        %v499 = vld [vmem:[%s441 + $0x8] sm:$0xff]
        %v500 = vld [vmem:[%s441 + $0x10] sm:$0xff]
        %v501 = vld [vmem:[%s441 + $0x18] sm:$0xff]
        %v502 = vld [vmem:[%s441 + $0x20] sm:$0xff]
        %v503 = vld [vmem:[%s441 + $0x28] sm:$0xff]
        %v504 = vld [vmem:[%s441 + $0x30] sm:$0xff]
        %v505 = vld [vmem:[%s441 + $0x38] sm:$0xff]
        %v506 = vld [vmem:[%s1] sm:$0x1]
        %v507 = vld [vmem:[%s2] sm:$0x1]
        %v508 = vld [vmem:[%s7] sm:$0x1]
        %v509 = vld [vmem:[%s8] sm:$0x1]
        %v510 = vld [vmem:[%s3] sm:$0xf]
        %v511 = vld [vmem:[%s3 + $0x4] sm:$0xf]
        %v512 = vld [vmem:[%s5] sm:$0xf]
        %v513 = vld [vmem:[%s5 + $0x4] sm:$0xf]
        %v514 = vld [vmem:[%s4] sm:$0xff]
        %v515 = vld [vmem:[%s4 + $0x8] sm:$0xff]
        %v516 = vld [vmem:[%s6] sm:$0xff]
        %v517 = vld [vmem:[%s6 + $0x8] sm:$0xff]
        %v518 = vld [vmem:[%s10] sm:$0x1]
        %v519 = vld [vmem:[%s12] sm:$0x1]
        %v520 = vld [vmem:[#allocation5] sm:$0xf]
        %v521 = vld [vmem:[#allocation5 + $0x4] sm:$0xf]
        %v522 = vld [vmem:[#allocation5 + $0x8] sm:$0xf]
        %v523 = vld [vmem:[#allocation5 + $0xc] sm:$0xf]
        %v524 = vld [vmem:[#allocation5 + $0x10] sm:$0xf]
        %v525 = vld [vmem:[#allocation5 + $0x14] sm:$0xf]
        %v526 = vld [vmem:[#allocation5 + $0x18] sm:$0xf]
        %v527 = vld [vmem:[#allocation5 + $0x1c] sm:$0xf]
        %v528 = vld [vmem:[#allocation5 + $0x20] sm:$0xf]
        %v529 = vld [vmem:[#allocation5 + $0x24] sm:$0xf]
        %v530 = vld [vmem:[#allocation5 + $0x28] sm:$0xf]
        %v531 = vld [vmem:[#allocation5 + $0x2c] sm:$0xf]
        %v532 = vld [vmem:[#allocation5 + $0x30] sm:$0xf]
        %v533 = vld [vmem:[#allocation5 + $0x34] sm:$0xf]
        %v534 = vld [vmem:[#allocation5 + $0x38] sm:$0xf]
        %v535 = vld [vmem:[#allocation5 + $0x3c] sm:$0xf]
        %v536 = vld [vmem:[#allocation7] sm:$0xf]
        %v537 = vld [vmem:[#allocation7 + $0x4] sm:$0xf]
        %v538 = vld [vmem:[#allocation7 + $0x8] sm:$0xf]
        %v539 = vld [vmem:[#allocation7 + $0xc] sm:$0xf]
        %v540 = vld [vmem:[#allocation7 + $0x10] sm:$0xf]
        %v541 = vld [vmem:[#allocation7 + $0x14] sm:$0xf]
        %v542 = vld [vmem:[#allocation7 + $0x18] sm:$0xf]
        %v543 = vld [vmem:[#allocation7 + $0x1c] sm:$0xf]
        %v544 = vld [vmem:[#allocation7 + $0x20] sm:$0xf]
        %v545 = vld [vmem:[#allocation7 + $0x24] sm:$0xf]
        %v546 = vld [vmem:[#allocation7 + $0x28] sm:$0xf]
        %v547 = vld [vmem:[#allocation7 + $0x2c] sm:$0xf]
        %v548 = vld [vmem:[#allocation7 + $0x30] sm:$0xf]
        %v549 = vld [vmem:[#allocation7 + $0x34] sm:$0xf]
        %v550 = vld [vmem:[#allocation7 + $0x38] sm:$0xf]
        %v551 = vld [vmem:[#allocation7 + $0x3c] sm:$0xf]
        %552 = vadd.xlane.f32.xlu0 %v498
        %v553 = vpop.xlane.xlu0 %552
        %554 = vadd.xlane.f32.xlu0 %v499
        %v555 = vpop.xlane.xlu0 %554
        %556 = vadd.xlane.f32.xlu0 %v500
        %v557 = vpop.xlane.xlu0 %556
        %558 = vadd.xlane.f32.xlu0 %v501
        %v559 = vpop.xlane.xlu0 %558
        %560 = vadd.xlane.f32.xlu0 %v502
        %v561 = vpop.xlane.xlu0 %560
        %562 = vadd.xlane.f32.xlu0 %v503
        %v563 = vpop.xlane.xlu0 %562
        %564 = vadd.xlane.f32.xlu0 %v504
        %v565 = vpop.xlane.xlu0 %564
        %566 = vadd.xlane.f32.xlu0 %v505
        %v567 = vpop.xlane.xlu0 %566
        %v568 = vmul.f32 %v553, 0.0625
        %v569 = vmul.f32 %v555, 0.0625
        %v570 = vmul.f32 %v557, 0.0625
        %v571 = vmul.f32 %v559, 0.0625
        %v572 = vmul.f32 %v561, 0.0625
        %v573 = vmul.f32 %v563, 0.0625
        %v574 = vmul.f32 %v565, 0.0625
        %v575 = vmul.f32 %v567, 0.0625
        %v576 = vmul.f32 %v498, %v498
        %v577 = vmul.f32 %v499, %v499
        %v578 = vmul.f32 %v500, %v500
        %v579 = vmul.f32 %v501, %v501
        %v580 = vmul.f32 %v502, %v502
        %v581 = vmul.f32 %v503, %v503
        %v582 = vmul.f32 %v504, %v504
        %v583 = vmul.f32 %v505, %v505
        %584 = vadd.xlane.f32.xlu0 %v576
        %v585 = vpop.xlane.xlu0 %584
        %586 = vadd.xlane.f32.xlu0 %v577
        %v587 = vpop.xlane.xlu0 %586
        %588 = vadd.xlane.f32.xlu0 %v578
        %v589 = vpop.xlane.xlu0 %588
        %590 = vadd.xlane.f32.xlu0 %v579
        %v591 = vpop.xlane.xlu0 %590
        %592 = vadd.xlane.f32.xlu0 %v580
        %v593 = vpop.xlane.xlu0 %592
        %594 = vadd.xlane.f32.xlu0 %v581
        %v595 = vpop.xlane.xlu0 %594
        %596 = vadd.xlane.f32.xlu0 %v582
        %v597 = vpop.xlane.xlu0 %596
        %598 = vadd.xlane.f32.xlu0 %v583
        %v599 = vpop.xlane.xlu0 %598
        %v600 = vmul.f32 %v585, 0.0625
        %v601 = vmul.f32 %v587, 0.0625
        %v602 = vmul.f32 %v589, 0.0625
        %v603 = vmul.f32 %v591, 0.0625
        %v604 = vmul.f32 %v593, 0.0625
        %v605 = vmul.f32 %v595, 0.0625
        %v606 = vmul.f32 %v597, 0.0625
        %v607 = vmul.f32 %v599, 0.0625
        %v608 = vmul.f32 %v568, %v568
        %v609 = vmul.f32 %v569, %v569
        %v610 = vmul.f32 %v570, %v570
        %v611 = vmul.f32 %v571, %v571
        %v612 = vmul.f32 %v572, %v572
        %v613 = vmul.f32 %v573, %v573
        %v614 = vmul.f32 %v574, %v574
        %v615 = vmul.f32 %v575, %v575
        %v616 = vsub.f32 %v600, %v608
        %v617 = vsub.f32 %v601, %v609
        %v618 = vsub.f32 %v602, %v610
        %v619 = vsub.f32 %v603, %v611
        %v620 = vsub.f32 %v604, %v612
        %v621 = vsub.f32 %v605, %v613
        %v622 = vsub.f32 %v606, %v614
        %v623 = vsub.f32 %v607, %v615
        %v624 = vmax.f32 %v616, 0.0
        %v625 = vmax.f32 %v617, 0.0
        %v626 = vmax.f32 %v618, 0.0
        %v627 = vmax.f32 %v619, 0.0
        %v628 = vmax.f32 %v620, 0.0
        %v629 = vmax.f32 %v621, 0.0
        %v630 = vmax.f32 %v622, 0.0
        %v631 = vmax.f32 %v623, 0.0
        %v632 = vsub.f32 %v498, %v568
        %v633 = vsub.f32 %v499, %v569
        %v634 = vsub.f32 %v500, %v570
        %v635 = vsub.f32 %v501, %v571
        %v636 = vsub.f32 %v502, %v572
        %v637 = vsub.f32 %v503, %v573
        %v638 = vsub.f32 %v504, %v574
        %v639 = vsub.f32 %v505, %v575
        %v640 = vadd.f32 %v624, 1e-05
        %v641 = vadd.f32 %v625, 1e-05
        %v642 = vadd.f32 %v626, 1e-05
        %v643 = vadd.f32 %v627, 1e-05
        %v644 = vadd.f32 %v628, 1e-05
        %v645 = vadd.f32 %v629, 1e-05
        %v646 = vadd.f32 %v630, 1e-05
        %v647 = vadd.f32 %v631, 1e-05
        %v648 = vrsqrt.pop %v640
        %v649 = vmul.f32 %v648, %v640
        %v650 = vmul.f32 %v649, %v648
        %v651 = vmul.f32 0.5, %v650
        %v652 = vsub.f32 1.5, %v651
        %v653 = vmul.f32 %v648, %v652
        %vm654 = vweird.f32 %v640
        %vm655 = vweird.f32 %v648
        %vm656 = vmor %vm654, %vm655
        %v657 = vsel %vm656, %v648, %v653
        %v658 = vrsqrt.pop %v641
        %v659 = vmul.f32 %v658, %v641
        %v660 = vmul.f32 %v659, %v658
        %v661 = vmul.f32 0.5, %v660
        %v662 = vsub.f32 1.5, %v661
        %v663 = vmul.f32 %v658, %v662
        %vm664 = vweird.f32 %v641
        %vm665 = vweird.f32 %v658
        %vm666 = vmor %vm664, %vm665
        %v667 = vsel %vm666, %v658, %v663
        %v668 = vrsqrt.pop %v642
        %v669 = vmul.f32 %v668, %v642
        %v670 = vmul.f32 %v669, %v668
        %v671 = vmul.f32 0.5, %v670
        %v672 = vsub.f32 1.5, %v671
        %v673 = vmul.f32 %v668, %v672
        %vm674 = vweird.f32 %v642
        %vm675 = vweird.f32 %v668
        %vm676 = vmor %vm674, %vm675
        %v677 = vsel %vm676, %v668, %v673
        %v678 = vrsqrt.pop %v643
        %v679 = vmul.f32 %v678, %v643
        %v680 = vmul.f32 %v679, %v678
        %v681 = vmul.f32 0.5, %v680
        %v682 = vsub.f32 1.5, %v681
        %v683 = vmul.f32 %v678, %v682
        %vm684 = vweird.f32 %v643
        %vm685 = vweird.f32 %v678
        %vm686 = vmor %vm684, %vm685
        %v687 = vsel %vm686, %v678, %v683
        %v688 = vrsqrt.pop %v644
        %v689 = vmul.f32 %v688, %v644
        %v690 = vmul.f32 %v689, %v688
        %v691 = vmul.f32 0.5, %v690
        %v692 = vsub.f32 1.5, %v691
        %v693 = vmul.f32 %v688, %v692
        %vm694 = vweird.f32 %v644
        %vm695 = vweird.f32 %v688
        %vm696 = vmor %vm694, %vm695
        %v697 = vsel %vm696, %v688, %v693
        %v698 = vrsqrt.pop %v645
        %v699 = vmul.f32 %v698, %v645
        %v700 = vmul.f32 %v699, %v698
        %v701 = vmul.f32 0.5, %v700
        %v702 = vsub.f32 1.5, %v701
        %v703 = vmul.f32 %v698, %v702
        %vm704 = vweird.f32 %v645
        %vm705 = vweird.f32 %v698
        %vm706 = vmor %vm704, %vm705
        %v707 = vsel %vm706, %v698, %v703
        %v708 = vrsqrt.pop %v646
        %v709 = vmul.f32 %v708, %v646
        %v710 = vmul.f32 %v709, %v708
        %v711 = vmul.f32 0.5, %v710
        %v712 = vsub.f32 1.5, %v711
        %v713 = vmul.f32 %v708, %v712
        %vm714 = vweird.f32 %v646
        %vm715 = vweird.f32 %v708
        %vm716 = vmor %vm714, %vm715
        %v717 = vsel %vm716, %v708, %v713
        %v718 = vrsqrt.pop %v647
        %v719 = vmul.f32 %v718, %v647
        %v720 = vmul.f32 %v719, %v718
        %v721 = vmul.f32 0.5, %v720
        %v722 = vsub.f32 1.5, %v721
        %v723 = vmul.f32 %v718, %v722
        %vm724 = vweird.f32 %v647
        %vm725 = vweird.f32 %v718
        %vm726 = vmor %vm724, %vm725
        %v727 = vsel %vm726, %v718, %v723
        %v728 = vmul.f32 %v632, %v657
        %v729 = vmul.f32 %v633, %v667
        %v730 = vmul.f32 %v634, %v677
        %v731 = vmul.f32 %v635, %v687
        %v732 = vmul.f32 %v636, %v697
        %v733 = vmul.f32 %v637, %v707
        %v734 = vmul.f32 %v638, %v717
        %v735 = vmul.f32 %v639, %v727
        %v737 = vperm.slane %v506, 0
        %v739 = vmul.f32 %v728, %v737
        %v740 = vmul.f32 %v729, %v737
        %v741 = vmul.f32 %v730, %v737
        %v742 = vmul.f32 %v731, %v737
        %v743 = vmul.f32 %v732, %v737
        %v744 = vmul.f32 %v733, %v737
        %v745 = vmul.f32 %v734, %v737
        %v746 = vmul.f32 %v735, %v737
        %v748 = vperm.slane %v507, 0
        %v750 = vadd.f32 %v739, %v748
        %v751 = vadd.f32 %v740, %v748
        %v752 = vadd.f32 %v741, %v748
        %v753 = vadd.f32 %v742, %v748
        %v754 = vadd.f32 %v743, %v748
        %v755 = vadd.f32 %v744, %v748
        %v756 = vadd.f32 %v745, %v748
        %v757 = vadd.f32 %v746, %v748
        %v758 = vpack.c.bf16 %v750, %v750
        %v759 = vpack.c.bf16 %v751, %v751
        %v760 = vpack.c.bf16 %v752, %v752
        %v761 = vpack.c.bf16 %v753, %v753
        %v762 = vpack.c.bf16 %v754, %v754
        %v763 = vpack.c.bf16 %v755, %v755
        %v764 = vpack.c.bf16 %v756, %v756
        %v765 = vpack.c.bf16 %v757, %v757
        %767 = vset.pattern.permute.xlu0 0
        %768 = vperm.xlu0 %767, %v514
        %v769 = vpop.permute.xlu0 %768
        %772 = vset.pattern.permute.xlu0 0
        %773 = vperm.xlu0 %772, %v515
        %v774 = vpop.permute.xlu0 %773
        %v778 = vunpack.c.l.b16 %v510
        %v779 = vunpack.c.l.b16 %v511
        %v780 = vpack.c.b16 %v779, %v778
        %v783 = vunpack.c.l.b16 %v758
        %v784 = vunpack.c.l.b16 %v759
        %v785 = vpack.c.b16 %v784, %v783
        %vm787 = vcmask 130048
        %v789 = vsel %vm787, %v780, 0
        %791 = vmatpush.bf16.msra.mxu0 0
        %792 = vmatpush.bf16.msra.mxu0 0
        %793 = vmatpush.bf16.msra.mxu0 0
        %794 = vmatpush.bf16.msra.mxu0 0
        %795 = vmatpush.bf16.msra.mxu0 0
        %796 = vmatpush.bf16.msra.mxu0 0
        %797 = vmatpush.bf16.msra.mxu0 0
        %798 = vmatpush.bf16.msra.mxu0 %v785
        %799 = vmatmul.bf16.gmra.mxu0 %v789
        %v800 = vpop.f32.mrf.mxu0
        %v801 = vadd.f32 %v769, %v800
        %v802 = vpop.f32.mrf.mxu0
        %v803 = vadd.f32 %v774, %v802
        %804 = vdwg.mxu0
        %v805 = vmul.f32 %v801, 0.2
        %v806 = vmul.f32 %v803, 0.2
        %v807 = vmax.f32 %v801, %v805
        %v808 = vmax.f32 %v803, %v806
        %v809 = vpack.c.bf16 %v808, %v807
        %811 = vset.pattern.permute.xlu0 0
        %812 = vperm.xlu0 %811, %v516
        %v813 = vpop.permute.xlu0 %812
        %816 = vset.pattern.permute.xlu0 0
        %817 = vperm.xlu0 %816, %v517
        %v818 = vpop.permute.xlu0 %817
        %v822 = vunpack.c.l.b16 %v512
        %v823 = vunpack.c.l.b16 %v513
        %v824 = vpack.c.b16 %v823, %v822
        %v826 = vsel %vm787, %v824, 0
        %828 = vmatpush.bf16.msra.mxu0 0
        %829 = vmatpush.bf16.msra.mxu0 0
        %830 = vmatpush.bf16.msra.mxu0 0
        %831 = vmatpush.bf16.msra.mxu0 0
        %832 = vmatpush.bf16.msra.mxu0 0
        %833 = vmatpush.bf16.msra.mxu0 0
        %834 = vmatpush.bf16.msra.mxu0 0
        %835 = vmatpush.bf16.msra.mxu0 %v809
        %836 = vmatmul.bf16.gmra.mxu0 %v826
        %v837 = vpop.f32.mrf.mxu0
        %v838 = vadd.f32 %v813, %v837
        %v839 = vpop.f32.mrf.mxu0
        %v840 = vadd.f32 %v818, %v839
        %841 = vdwg.mxu0
        %v844 = vunpack.c.l.b16 %v760
        %v845 = vunpack.c.l.b16 %v761
        %v846 = vpack.c.b16 %v845, %v844
        %848 = vmatpush.bf16.msra.mxu0 0
        %849 = vmatpush.bf16.msra.mxu0 0
        %850 = vmatpush.bf16.msra.mxu0 0
        %851 = vmatpush.bf16.msra.mxu0 0
        %852 = vmatpush.bf16.msra.mxu0 0
        %853 = vmatpush.bf16.msra.mxu0 0
        %854 = vmatpush.bf16.msra.mxu0 0
        %855 = vmatpush.bf16.msra.mxu0 %v846
        %856 = vmatmul.bf16.gmra.mxu0 %v789
        %v857 = vpop.f32.mrf.mxu0
        %v858 = vadd.f32 %v769, %v857
        %v859 = vpop.f32.mrf.mxu0
        %v860 = vadd.f32 %v774, %v859
        %861 = vdwg.mxu0
        %v862 = vmul.f32 %v858, 0.2
        %v863 = vmul.f32 %v860, 0.2
        %v864 = vmax.f32 %v858, %v862
        %v865 = vmax.f32 %v860, %v863
        %v866 = vpack.c.bf16 %v865, %v864
        %867 = vmatpush.bf16.msra.mxu0 0
        %868 = vmatpush.bf16.msra.mxu0 0
        %869 = vmatpush.bf16.msra.mxu0 0
        %870 = vmatpush.bf16.msra.mxu0 0
        %871 = vmatpush.bf16.msra.mxu0 0
        %872 = vmatpush.bf16.msra.mxu0 0
        %873 = vmatpush.bf16.msra.mxu0 0
        %874 = vmatpush.bf16.msra.mxu0 %v866
        %875 = vmatmul.bf16.gmra.mxu0 %v826
        %v876 = vpop.f32.mrf.mxu0
        %v877 = vadd.f32 %v813, %v876
        %v878 = vpop.f32.mrf.mxu0
        %v879 = vadd.f32 %v818, %v878
        %880 = vdwg.mxu0
        %v883 = vunpack.c.l.b16 %v762
        %v884 = vunpack.c.l.b16 %v763
        %v885 = vpack.c.b16 %v884, %v883
        %887 = vmatpush.bf16.msra.mxu0 0
        %888 = vmatpush.bf16.msra.mxu0 0
        %889 = vmatpush.bf16.msra.mxu0 0
        %890 = vmatpush.bf16.msra.mxu0 0
        %891 = vmatpush.bf16.msra.mxu0 0
        %892 = vmatpush.bf16.msra.mxu0 0
        %893 = vmatpush.bf16.msra.mxu0 0
        %894 = vmatpush.bf16.msra.mxu0 %v885
        %895 = vmatmul.bf16.gmra.mxu0 %v789
        %v896 = vpop.f32.mrf.mxu0
        %v897 = vadd.f32 %v769, %v896
        %v898 = vpop.f32.mrf.mxu0
        %v899 = vadd.f32 %v774, %v898
        %900 = vdwg.mxu0
        %v901 = vmul.f32 %v897, 0.2
        %v902 = vmul.f32 %v899, 0.2
        %v903 = vmax.f32 %v897, %v901
        %v904 = vmax.f32 %v899, %v902
        %v905 = vpack.c.bf16 %v904, %v903
        %906 = vmatpush.bf16.msra.mxu0 0
        %907 = vmatpush.bf16.msra.mxu0 0
        %908 = vmatpush.bf16.msra.mxu0 0
        %909 = vmatpush.bf16.msra.mxu0 0
        %910 = vmatpush.bf16.msra.mxu0 0
        %911 = vmatpush.bf16.msra.mxu0 0
        %912 = vmatpush.bf16.msra.mxu0 0
        %913 = vmatpush.bf16.msra.mxu0 %v905
        %914 = vmatmul.bf16.gmra.mxu0 %v826
        %v915 = vpop.f32.mrf.mxu0
        %v916 = vadd.f32 %v813, %v915
        %v917 = vpop.f32.mrf.mxu0
        %v918 = vadd.f32 %v818, %v917
        %919 = vdwg.mxu0
        %v922 = vunpack.c.l.b16 %v764
        %v923 = vunpack.c.l.b16 %v765
        %v924 = vpack.c.b16 %v923, %v922
        %926 = vmatpush.bf16.msra.mxu0 0
        %927 = vmatpush.bf16.msra.mxu0 0
        %928 = vmatpush.bf16.msra.mxu0 0
        %929 = vmatpush.bf16.msra.mxu0 0
        %930 = vmatpush.bf16.msra.mxu0 0
        %931 = vmatpush.bf16.msra.mxu0 0
        %932 = vmatpush.bf16.msra.mxu0 0
        %933 = vmatpush.bf16.msra.mxu0 %v924
        %934 = vmatmul.bf16.gmra.mxu0 %v789
        %v935 = vpop.f32.mrf.mxu0
        %v936 = vadd.f32 %v769, %v935
        %v937 = vpop.f32.mrf.mxu0
        %v938 = vadd.f32 %v774, %v937
        %939 = vdwg.mxu0
        %v940 = vmul.f32 %v936, 0.2
        %v941 = vmul.f32 %v938, 0.2
        %v942 = vmax.f32 %v936, %v940
        %v943 = vmax.f32 %v938, %v941
        %v944 = vpack.c.bf16 %v943, %v942
        %945 = vmatpush.bf16.msra.mxu0 0
        %946 = vmatpush.bf16.msra.mxu0 0
        %947 = vmatpush.bf16.msra.mxu0 0
        %948 = vmatpush.bf16.msra.mxu0 0
        %949 = vmatpush.bf16.msra.mxu0 0
        %950 = vmatpush.bf16.msra.mxu0 0
        %951 = vmatpush.bf16.msra.mxu0 0
        %952 = vmatpush.bf16.msra.mxu0 %v944
        %953 = vmatmul.bf16.gmra.mxu0 %v826
        %v954 = vpop.f32.mrf.mxu0
        %v955 = vadd.f32 %v813, %v954
        %v956 = vpop.f32.mrf.mxu0
        %v957 = vadd.f32 %v818, %v956
        %958 = vdwg.mxu0
        %v959 = vadd.f32 %v838, %v498
        %v960 = vadd.f32 %v840, %v499
        %v961 = vadd.f32 %v877, %v500
        %v962 = vadd.f32 %v879, %v501
        %v963 = vadd.f32 %v916, %v502
        %v964 = vadd.f32 %v918, %v503
        %v965 = vadd.f32 %v955, %v504
        %v966 = vadd.f32 %v957, %v505
        %v967 = vlaneseq
        %v968 = vand.u32 %v967, 127
        %vm969 = vcmp.lt.s32.totalorder %v968, 16
        %v970 = vsel %vm969, 1, 0
        %vm971 = vcmp.eq.s32.totalorder %v970, 1
        %v972 = vsel %vm971, %v959, 0.0
        %v973 = vsel %vm971, %v960, 0.0
        %v974 = vsel %vm971, %v961, 0.0
        %v975 = vsel %vm971, %v962, 0.0
        %v976 = vsel %vm971, %v963, 0.0
        %v977 = vsel %vm971, %v964, 0.0
        %v978 = vsel %vm971, %v965, 0.0
        %v979 = vsel %vm971, %v966, 0.0
        %980 = vadd.xlane.f32.xlu0 %v972
        %v981 = vpop.xlane.xlu0 %980
        %982 = vadd.xlane.f32.xlu0 %v973
        %v983 = vpop.xlane.xlu0 %982
        %984 = vadd.xlane.f32.xlu0 %v974
        %v985 = vpop.xlane.xlu0 %984
        %986 = vadd.xlane.f32.xlu0 %v975
        %v987 = vpop.xlane.xlu0 %986
        %988 = vadd.xlane.f32.xlu0 %v976
        %v989 = vpop.xlane.xlu0 %988
        %990 = vadd.xlane.f32.xlu0 %v977
        %v991 = vpop.xlane.xlu0 %990
        %992 = vadd.xlane.f32.xlu0 %v978
        %v993 = vpop.xlane.xlu0 %992
        %994 = vadd.xlane.f32.xlu0 %v979
        %v995 = vpop.xlane.xlu0 %994
        %v996 = vmul.f32 %v981, 0.0625
        %v997 = vmul.f32 %v983, 0.0625
        %v998 = vmul.f32 %v985, 0.0625
        %v999 = vmul.f32 %v987, 0.0625
        %v1000 = vmul.f32 %v989, 0.0625
        %v1001 = vmul.f32 %v991, 0.0625
        %v1002 = vmul.f32 %v993, 0.0625
        %v1003 = vmul.f32 %v995, 0.0625
        %v1004 = vmul.f32 %v972, %v972
        %v1005 = vmul.f32 %v973, %v973
        %v1006 = vmul.f32 %v974, %v974
        %v1007 = vmul.f32 %v975, %v975
        %v1008 = vmul.f32 %v976, %v976
        %v1009 = vmul.f32 %v977, %v977
        %v1010 = vmul.f32 %v978, %v978
        %v1011 = vmul.f32 %v979, %v979
        %1012 = vadd.xlane.f32.xlu0 %v1004
        %v1013 = vpop.xlane.xlu0 %1012
        %1014 = vadd.xlane.f32.xlu0 %v1005
        %v1015 = vpop.xlane.xlu0 %1014
        %1016 = vadd.xlane.f32.xlu0 %v1006
        %v1017 = vpop.xlane.xlu0 %1016
        %1018 = vadd.xlane.f32.xlu0 %v1007
        %v1019 = vpop.xlane.xlu0 %1018
        %1020 = vadd.xlane.f32.xlu0 %v1008
        %v1021 = vpop.xlane.xlu0 %1020
        %1022 = vadd.xlane.f32.xlu0 %v1009
        %v1023 = vpop.xlane.xlu0 %1022
        %1024 = vadd.xlane.f32.xlu0 %v1010
        %v1025 = vpop.xlane.xlu0 %1024
        %1026 = vadd.xlane.f32.xlu0 %v1011
        %v1027 = vpop.xlane.xlu0 %1026
        %v1028 = vmul.f32 %v1013, 0.0625
        %v1029 = vmul.f32 %v1015, 0.0625
        %v1030 = vmul.f32 %v1017, 0.0625
        %v1031 = vmul.f32 %v1019, 0.0625
        %v1032 = vmul.f32 %v1021, 0.0625
        %v1033 = vmul.f32 %v1023, 0.0625
        %v1034 = vmul.f32 %v1025, 0.0625
        %v1035 = vmul.f32 %v1027, 0.0625
        %v1036 = vmul.f32 %v996, %v996
        %v1037 = vmul.f32 %v997, %v997
        %v1038 = vmul.f32 %v998, %v998
        %v1039 = vmul.f32 %v999, %v999
        %v1040 = vmul.f32 %v1000, %v1000
        %v1041 = vmul.f32 %v1001, %v1001
        %v1042 = vmul.f32 %v1002, %v1002
        %v1043 = vmul.f32 %v1003, %v1003
        %v1044 = vsub.f32 %v1028, %v1036
        %v1045 = vsub.f32 %v1029, %v1037
        %v1046 = vsub.f32 %v1030, %v1038
        %v1047 = vsub.f32 %v1031, %v1039
        %v1048 = vsub.f32 %v1032, %v1040
        %v1049 = vsub.f32 %v1033, %v1041
        %v1050 = vsub.f32 %v1034, %v1042
        %v1051 = vsub.f32 %v1035, %v1043
        %v1052 = vmax.f32 %v1044, 0.0
        %v1053 = vmax.f32 %v1045, 0.0
        %v1054 = vmax.f32 %v1046, 0.0
        %v1055 = vmax.f32 %v1047, 0.0
        %v1056 = vmax.f32 %v1048, 0.0
        %v1057 = vmax.f32 %v1049, 0.0
        %v1058 = vmax.f32 %v1050, 0.0
        %v1059 = vmax.f32 %v1051, 0.0
        %v1060 = vsub.f32 %v972, %v996
        %v1061 = vsub.f32 %v973, %v997
        %v1062 = vsub.f32 %v974, %v998
        %v1063 = vsub.f32 %v975, %v999
        %v1064 = vsub.f32 %v976, %v1000
        %v1065 = vsub.f32 %v977, %v1001
        %v1066 = vsub.f32 %v978, %v1002
        %v1067 = vsub.f32 %v979, %v1003
        %v1068 = vadd.f32 %v1052, 1e-05
        %v1069 = vadd.f32 %v1053, 1e-05
        %v1070 = vadd.f32 %v1054, 1e-05
        %v1071 = vadd.f32 %v1055, 1e-05
        %v1072 = vadd.f32 %v1056, 1e-05
        %v1073 = vadd.f32 %v1057, 1e-05
        %v1074 = vadd.f32 %v1058, 1e-05
        %v1075 = vadd.f32 %v1059, 1e-05
        %v1076 = vrsqrt.pop %v1068
        %v1077 = vmul.f32 %v1076, %v1068
        %v1078 = vmul.f32 %v1077, %v1076
        %v1079 = vmul.f32 0.5, %v1078
        %v1080 = vsub.f32 1.5, %v1079
        %v1081 = vmul.f32 %v1076, %v1080
        %vm1082 = vweird.f32 %v1068
        %vm1083 = vweird.f32 %v1076
        %vm1084 = vmor %vm1082, %vm1083
        %v1085 = vsel %vm1084, %v1076, %v1081
        %v1086 = vrsqrt.pop %v1069
        %v1087 = vmul.f32 %v1086, %v1069
        %v1088 = vmul.f32 %v1087, %v1086
        %v1089 = vmul.f32 0.5, %v1088
        %v1090 = vsub.f32 1.5, %v1089
        %v1091 = vmul.f32 %v1086, %v1090
        %vm1092 = vweird.f32 %v1069
        %vm1093 = vweird.f32 %v1086
        %vm1094 = vmor %vm1092, %vm1093
        %v1095 = vsel %vm1094, %v1086, %v1091
        %v1096 = vrsqrt.pop %v1070
        %v1097 = vmul.f32 %v1096, %v1070
        %v1098 = vmul.f32 %v1097, %v1096
        %v1099 = vmul.f32 0.5, %v1098
        %v1100 = vsub.f32 1.5, %v1099
        %v1101 = vmul.f32 %v1096, %v1100
        %vm1102 = vweird.f32 %v1070
        %vm1103 = vweird.f32 %v1096
        %vm1104 = vmor %vm1102, %vm1103
        %v1105 = vsel %vm1104, %v1096, %v1101
        %v1106 = vrsqrt.pop %v1071
        %v1107 = vmul.f32 %v1106, %v1071
        %v1108 = vmul.f32 %v1107, %v1106
        %v1109 = vmul.f32 0.5, %v1108
        %v1110 = vsub.f32 1.5, %v1109
        %v1111 = vmul.f32 %v1106, %v1110
        %vm1112 = vweird.f32 %v1071
        %vm1113 = vweird.f32 %v1106
        %vm1114 = vmor %vm1112, %vm1113
        %v1115 = vsel %vm1114, %v1106, %v1111
        %v1116 = vrsqrt.pop %v1072
        %v1117 = vmul.f32 %v1116, %v1072
        %v1118 = vmul.f32 %v1117, %v1116
        %v1119 = vmul.f32 0.5, %v1118
        %v1120 = vsub.f32 1.5, %v1119
        %v1121 = vmul.f32 %v1116, %v1120
        %vm1122 = vweird.f32 %v1072
        %vm1123 = vweird.f32 %v1116
        %vm1124 = vmor %vm1122, %vm1123
        %v1125 = vsel %vm1124, %v1116, %v1121
        %v1126 = vrsqrt.pop %v1073
        %v1127 = vmul.f32 %v1126, %v1073
        %v1128 = vmul.f32 %v1127, %v1126
        %v1129 = vmul.f32 0.5, %v1128
        %v1130 = vsub.f32 1.5, %v1129
        %v1131 = vmul.f32 %v1126, %v1130
        %vm1132 = vweird.f32 %v1073
        %vm1133 = vweird.f32 %v1126
        %vm1134 = vmor %vm1132, %vm1133
        %v1135 = vsel %vm1134, %v1126, %v1131
        %v1136 = vrsqrt.pop %v1074
        %v1137 = vmul.f32 %v1136, %v1074
        %v1138 = vmul.f32 %v1137, %v1136
        %v1139 = vmul.f32 0.5, %v1138
        %v1140 = vsub.f32 1.5, %v1139
        %v1141 = vmul.f32 %v1136, %v1140
        %vm1142 = vweird.f32 %v1074
        %vm1143 = vweird.f32 %v1136
        %vm1144 = vmor %vm1142, %vm1143
        %v1145 = vsel %vm1144, %v1136, %v1141
        %v1146 = vrsqrt.pop %v1075
        %v1147 = vmul.f32 %v1146, %v1075
        %v1148 = vmul.f32 %v1147, %v1146
        %v1149 = vmul.f32 0.5, %v1148
        %v1150 = vsub.f32 1.5, %v1149
        %v1151 = vmul.f32 %v1146, %v1150
        %vm1152 = vweird.f32 %v1075
        %vm1153 = vweird.f32 %v1146
        %vm1154 = vmor %vm1152, %vm1153
        %v1155 = vsel %vm1154, %v1146, %v1151
        %v1156 = vmul.f32 %v1060, %v1085
        %v1157 = vmul.f32 %v1061, %v1095
        %v1158 = vmul.f32 %v1062, %v1105
        %v1159 = vmul.f32 %v1063, %v1115
        %v1160 = vmul.f32 %v1064, %v1125
        %v1161 = vmul.f32 %v1065, %v1135
        %v1162 = vmul.f32 %v1066, %v1145
        %v1163 = vmul.f32 %v1067, %v1155
        %v1165 = vperm.slane %v508, 0
        %v1167 = vmul.f32 %v1156, %v1165
        %v1168 = vmul.f32 %v1157, %v1165
        %v1169 = vmul.f32 %v1158, %v1165
        %v1170 = vmul.f32 %v1159, %v1165
        %v1171 = vmul.f32 %v1160, %v1165
        %v1172 = vmul.f32 %v1161, %v1165
        %v1173 = vmul.f32 %v1162, %v1165
        %v1174 = vmul.f32 %v1163, %v1165
        %v1176 = vperm.slane %v509, 0
        %v1178 = vadd.f32 %v1167, %v1176
        %v1179 = vadd.f32 %v1168, %v1176
        %v1180 = vadd.f32 %v1169, %v1176
        %v1181 = vadd.f32 %v1170, %v1176
        %v1182 = vadd.f32 %v1171, %v1176
        %v1183 = vadd.f32 %v1172, %v1176
        %v1184 = vadd.f32 %v1173, %v1176
        %v1185 = vadd.f32 %v1174, %v1176
        %v1186 = vpack.c.bf16 %v1179, %v1178
        %v1187 = vpack.c.bf16 %v1181, %v1180
        %v1188 = vpack.c.bf16 %v1183, %v1182
        %v1189 = vpack.c.bf16 %v1185, %v1184
        %v1191 = vperm.slane %v518, 0
        %v1209 = vunpack.c.l.b16 %v520
        %v1210 = vunpack.c.l.b16 %v521
        %v1211 = vunpack.c.l.b16 %v522
        %v1212 = vunpack.c.l.b16 %v523
        %v1213 = vunpack.c.l.b16 %v524
        %v1214 = vunpack.c.l.b16 %v525
        %v1215 = vunpack.c.l.b16 %v526
        %v1216 = vunpack.c.l.b16 %v527
        %v1217 = vunpack.c.l.b16 %v528
        %v1218 = vunpack.c.l.b16 %v529
        %v1219 = vunpack.c.l.b16 %v530
        %v1220 = vunpack.c.l.b16 %v531
        %v1221 = vunpack.c.l.b16 %v532
        %v1222 = vunpack.c.l.b16 %v533
        %v1223 = vunpack.c.l.b16 %v534
        %v1224 = vunpack.c.l.b16 %v535
        %v1225 = vpack.c.b16 %v1210, %v1209
        %v1226 = vpack.c.b16 %v1212, %v1211
        %v1227 = vpack.c.b16 %v1214, %v1213
        %v1228 = vpack.c.b16 %v1216, %v1215
        %v1229 = vpack.c.b16 %v1218, %v1217
        %v1230 = vpack.c.b16 %v1220, %v1219
        %v1231 = vpack.c.b16 %v1222, %v1221
        %v1232 = vpack.c.b16 %v1224, %v1223
        %1241 = vmatpush.bf16.xpose.msra.mxu0 %v1232
        %1242 = vmatpush.bf16.xpose.msra.mxu0 %v1231
        %1243 = vmatpush.bf16.xpose.msra.mxu0 %v1230
        %1244 = vmatpush.bf16.xpose.msra.mxu0 %v1229
        %1245 = vmatpush.bf16.xpose.msra.mxu0 %v1228
        %1246 = vmatpush.bf16.xpose.msra.mxu0 %v1227
        %1247 = vmatpush.bf16.xpose.msra.mxu0 %v1226
        %1248 = vmatpush.bf16.xpose.msra.mxu0 %v1225
        %1249 = vmatmul.bf16.gmra.mxu0 %v1186
        %v1250 = vpop.f32.mrf.mxu0
        %v1251 = vadd.f32 %v1191, %v1250
        %v1252 = vpop.f32.mrf.mxu0
        %v1253 = vadd.f32 %v1191, %v1252
        %1254 = vmatmul.bf16.gmra.mxu0 %v1187
        %v1255 = vpop.f32.mrf.mxu0
        %v1256 = vadd.f32 %v1191, %v1255
        %v1257 = vpop.f32.mrf.mxu0
        %v1258 = vadd.f32 %v1191, %v1257
        %1259 = vmatmul.bf16.gmra.mxu0 %v1188
        %v1260 = vpop.f32.mrf.mxu0
        %v1261 = vadd.f32 %v1191, %v1260
        %v1262 = vpop.f32.mrf.mxu0
        %v1263 = vadd.f32 %v1191, %v1262
        %1264 = vmatmul.bf16.gmra.mxu0 %v1189
        %v1265 = vpop.f32.mrf.mxu0
        %v1266 = vadd.f32 %v1191, %v1265
        %v1267 = vpop.f32.mrf.mxu0
        %v1268 = vadd.f32 %v1191, %v1267
        %1269 = vdwg.mxu0
        %v1270 = vmul.f32 %v1251, 0.2
        %v1271 = vmul.f32 %v1253, 0.2
        %v1272 = vmul.f32 %v1256, 0.2
        %v1273 = vmul.f32 %v1258, 0.2
        %v1274 = vmul.f32 %v1261, 0.2
        %v1275 = vmul.f32 %v1263, 0.2
        %v1276 = vmul.f32 %v1266, 0.2
        %v1277 = vmul.f32 %v1268, 0.2
        %v1278 = vmax.f32 %v1251, %v1270
        %v1279 = vmax.f32 %v1253, %v1271
        %v1280 = vmax.f32 %v1256, %v1272
        %v1281 = vmax.f32 %v1258, %v1273
        %v1282 = vmax.f32 %v1261, %v1274
        %v1283 = vmax.f32 %v1263, %v1275
        %v1284 = vmax.f32 %v1266, %v1276
        %v1285 = vmax.f32 %v1268, %v1277
        %v1286 = vpack.c.bf16 %v1279, %v1278
        %v1287 = vpack.c.bf16 %v1281, %v1280
        %v1288 = vpack.c.bf16 %v1283, %v1282
        %v1289 = vpack.c.bf16 %v1285, %v1284
        %v1291 = vperm.slane %v519, 0
        %v1309 = vunpack.c.l.b16 %v536
        %v1310 = vunpack.c.l.b16 %v537
        %v1311 = vunpack.c.l.b16 %v538
        %v1312 = vunpack.c.l.b16 %v539
        %v1313 = vunpack.c.l.b16 %v540
        %v1314 = vunpack.c.l.b16 %v541
        %v1315 = vunpack.c.l.b16 %v542
        %v1316 = vunpack.c.l.b16 %v543
        %v1317 = vunpack.c.l.b16 %v544
        %v1318 = vunpack.c.l.b16 %v545
        %v1319 = vunpack.c.l.b16 %v546
        %v1320 = vunpack.c.l.b16 %v547
        %v1321 = vunpack.c.l.b16 %v548
        %v1322 = vunpack.c.l.b16 %v549
        %v1323 = vunpack.c.l.b16 %v550
        %v1324 = vunpack.c.l.b16 %v551
        %v1325 = vpack.c.b16 %v1310, %v1309
        %v1326 = vpack.c.b16 %v1312, %v1311
        %v1327 = vpack.c.b16 %v1314, %v1313
        %v1328 = vpack.c.b16 %v1316, %v1315
        %v1329 = vpack.c.b16 %v1318, %v1317
        %v1330 = vpack.c.b16 %v1320, %v1319
        %v1331 = vpack.c.b16 %v1322, %v1321
        %v1332 = vpack.c.b16 %v1324, %v1323
        %1341 = vmatpush.bf16.xpose.msra.mxu0 %v1332
        %1342 = vmatpush.bf16.xpose.msra.mxu0 %v1331
        %1343 = vmatpush.bf16.xpose.msra.mxu0 %v1330
        %1344 = vmatpush.bf16.xpose.msra.mxu0 %v1329
        %1345 = vmatpush.bf16.xpose.msra.mxu0 %v1328
        %1346 = vmatpush.bf16.xpose.msra.mxu0 %v1327
        %1347 = vmatpush.bf16.xpose.msra.mxu0 %v1326
        %1348 = vmatpush.bf16.xpose.msra.mxu0 %v1325
        %1349 = vmatmul.bf16.gmra.mxu0 %v1286
        %v1350 = vpop.f32.mrf.mxu0
        %v1351 = vadd.f32 %v1291, %v1350
        %v1352 = vpop.f32.mrf.mxu0
        %v1353 = vadd.f32 %v1291, %v1352
        %1354 = vmatmul.bf16.gmra.mxu0 %v1287
        %v1355 = vpop.f32.mrf.mxu0
        %v1356 = vadd.f32 %v1291, %v1355
        %v1357 = vpop.f32.mrf.mxu0
        %v1358 = vadd.f32 %v1291, %v1357
        %1359 = vmatmul.bf16.gmra.mxu0 %v1288
        %v1360 = vpop.f32.mrf.mxu0
        %v1361 = vadd.f32 %v1291, %v1360
        %v1362 = vpop.f32.mrf.mxu0
        %v1363 = vadd.f32 %v1291, %v1362
        %1364 = vmatmul.bf16.gmra.mxu0 %v1289
        %v1365 = vpop.f32.mrf.mxu0
        %v1366 = vadd.f32 %v1291, %v1365
        %v1367 = vpop.f32.mrf.mxu0
        %v1368 = vadd.f32 %v1291, %v1367
        %1369 = vdwg.mxu0
        %v1370 = vadd.f32 %v1351, %v972
        %v1371 = vadd.f32 %v1353, %v973
        %v1372 = vadd.f32 %v1356, %v974
        %v1373 = vadd.f32 %v1358, %v975
        %v1374 = vadd.f32 %v1361, %v976
        %v1375 = vadd.f32 %v1363, %v977
        %v1376 = vadd.f32 %v1366, %v978
        %v1377 = vadd.f32 %v1368, %v979
        %1378 = vst [vmem:[%s494] sm:$0xff] %v1370
        %1379 = vst [vmem:[%s494 + $0x8] sm:$0xff] %v1371
        %1380 = vst [vmem:[%s494 + $0x10] sm:$0xff] %v1372
        %1381 = vst [vmem:[%s494 + $0x18] sm:$0xff] %v1373
        %1382 = vst [vmem:[%s494 + $0x20] sm:$0xff] %v1374
        %1383 = vst [vmem:[%s494 + $0x28] sm:$0xff] %v1375
        %1384 = vst [vmem:[%s494 + $0x30] sm:$0xff] %v1376
        %1385 = vst [vmem:[%s494 + $0x38] sm:$0xff] %v1377
        %s1386 = sand.u32 %s317, 1
        %s1387 = scalar_lea.sflag [#allocation4], %s1386
        %s1388 = sand.u32 %s317, 1
        %s1389 = smul.addr %s1388, 64
        %s1390 = scalar_lea.vmem [#allocation8], %s1389
        // Predicated region
        $region85: #{tpu_custom_call.1} parent=71 // pred_check
          %p1391 = pneg %p327
        $region86: #{tpu_custom_call.1} parent=71 // pred_check_branch
          %1393 = sbr.rel (%p1391) target = $region88
        $region87: #{tpu_custom_call.1} parent=71 // pred_region
          %s1394 = smul.u32 4, %s31
          %1396 = vsyncadd %s1387, 0
          %s1397 = smul.addr %s1394, 2
          %s1398 = smul.addr %s1397, 8
          %s1399 = scalar_lea.hbm %s13, %s1398
          %s1400 = sshll.u32 %s1390, 4
          %s1401 = int_to_ptr.vmem [resolvable:$true] %s1400
          %s1402 = sshll.u32 %s1399, 4
          %s1403 = int_to_ptr.hbm [resolvable:$true] %s1402
          %1408 = dma.vmem_to_hbm [thread:$0]  %s1401, 1024, %s1403, %s1387, 128, 128, 8
        $region88: #{tpu_custom_call.1} parent=71 // pred_fallthru
          _
      $region72: #{tpu_custom_call.1} parent=5 // pred_fallthru
        _
      %p1409 = scmp.le.s32.totalorder 2, %s26
      // Predicated region
      $region89: #{tpu_custom_call.1} parent=5 // pred_check
        %p1410 = pneg %p1409
      $region90: #{tpu_custom_call.1} parent=5 // pred_check_branch
        %1412 = sbr.rel (%p1410) target = $region92
      $region91: #{tpu_custom_call.1} parent=5 // pred_region
        %s1413 = ssub.s32 %s26, 2
        // Predicated region
        $region93: #{tpu_custom_call.1} parent=91 // pred_check
          %p1414 = pneg %p333
        $region94: #{tpu_custom_call.1} parent=91 // pred_check_branch
          %1416 = sbr.rel (%p1414) target = $region96
        $region95: #{tpu_custom_call.1} parent=91 // pred_region
          %s1417 = sand.u32 %s318, 1
          %s1418 = scalar_lea.sflag [#allocation4], %s1417
          %s1419 = sand.u32 %s318, 1
          %s1420 = smul.addr %s1419, 64
          %s1421 = scalar_lea.vmem [#allocation8], %s1420
          %1423 = dma.done %s1418, 1024
        $region96: #{tpu_custom_call.1} parent=91 // pred_fallthru
          _
      $region92: #{tpu_custom_call.1} parent=5 // pred_fallthru
        _
    $region6: #{tpu_custom_call.1} parent=1 // loop_footer
      %s30 = sadd.s32 1, %s26
    $region7: #{tpu_custom_call.1} parent=1 // loop_footer_branch
      %25 = sbr.rel target = $region3
    $region8: #{tpu_custom_call.1} parent=1 // loop_exit
      _
    %1424 = vsyncpa [#allocation3], 1
    %s1425 = scalar_lea.sflag [#allocation3], 1
    %1426 = vsyncpa %s1425, 1
    %1427 = vsyncpa [#allocation6], 1
    %1428 = vsyncpa [#allocation4], 1
    %s1429 = scalar_lea.sflag [#allocation4], 1
    %1430 = vsyncpa %s1429, 1

</llo_original>
